<compile_context>
chip_gen: v5e
topology: v5e:2x2
jax: 0.10.0
libtpu: 0.0.40
codegen_flags: <defaults>
</compile_context>

<pallas_src>
import functools

import jax
import jax.numpy as jnp
from jax.experimental import pallas as pl
from jax.experimental.pallas import tpu as pltpu

# MXU operand dtype (bf16 -> ~2x MXU throughput on v6e/v7x, big win on v5e too, and
# half the patch/weight footprint).  Accumulation and all BN math remain f32.
MXU_DTYPE = jnp.bfloat16

# Left padding inside the padded VMEM scratch: 8 (one sublane tile) so the interior
# store lands at a sublane-aligned column offset.  Columns _PL-1 and _PL+W stay zero
# and provide the conv's left/right zero padding.
_PL = 8


# ----------------------------------------------------------------------------
# Fused kernel: [optional prev-layer BN+ReLU on the load path] -> 3x3 "same" conv as
# ONE MXU dot with K = 9*Cin over a row strip -> conv output + BN partial statistics.
# Grid = (batch, row_strip); both axes "parallel" (megacore-shardable).
# ----------------------------------------------------------------------------
def _conv_bn_kernel(apply_act, TH, x_ref, w_ref, scale_ref, shift_ref,
                    y_ref, stat_ref, xp_ref):
    # x_ref    : (1, H, W, Cin)  full image (block index does not change with the
    #                            strip axis -> no re-DMA between strips on a core)
    # w_ref    : (9*Cin, Cout)   3x3 weights (bf16), rows ordered (dy, dx, cin)
    # scale_ref: (1, Cin) f32    previous-layer BN scale (unused if not apply_act)
    # shift_ref: (1, Cin) f32    previous-layer BN shift (unused if not apply_act)
    # y_ref    : (1, TH*W, Cout) conv output strip, lane-dense last dim (f32)
    # stat_ref : (1, 1, 2, Cout) [sum(y), sum(y*y)] for this (batch, strip)
    # xp_ref   : VMEM (TH+2, W+_PL+2, Cin) f32 zero-padded strip scratch
    H, W, Cin = x_ref.shape[1], x_ref.shape[2], x_ref.shape[3]
    s = pl.program_id(1)
    n_s = pl.num_programs(1)
    row0 = pl.multiple_of(s * TH, TH)           # first output row of this strip

    def load_rows(start, count):
        rows = x_ref[0, pl.ds(start, count), :, :]
        if apply_act:
            # Previous block's BatchNorm + ReLU fused into this conv's load path
            # (kept in f32: v5e VPU has no bf16).
            rows = jnp.maximum(rows * scale_ref[0] + shift_ref[0], 0.0)
        return rows.astype(xp_ref.dtype)

    # --- Fill the padded strip scratch ------------------------------------------
    # Interior TH rows (fully overwritten every step -> no full-scratch clear needed).
    xp_ref[1:TH + 1, _PL:_PL + W, :] = load_rows(row0, TH)

    # Left / right zero-padding columns: only the two columns the taps actually read.
    xp_ref[:, _PL - 1:_PL, :] = jnp.zeros((TH + 2, 1, Cin), xp_ref.dtype)
    xp_ref[:, _PL + W:_PL + W + 1, :] = jnp.zeros((TH + 2, 1, Cin), xp_ref.dtype)

    # Top halo row: previous image row, or zeros at the image's top edge.
    @pl.when(s == 0)
    def _():
        xp_ref[0:1, _PL:_PL + W, :] = jnp.zeros((1, W, Cin), xp_ref.dtype)

    @pl.when(s > 0)
    def _():
        xp_ref[0:1, _PL:_PL + W, :] = load_rows(row0 - 1, 1)

    # Bottom halo row: next image row, or zeros at the image's bottom edge.
    @pl.when(s == n_s - 1)
    def _():
        xp_ref[TH + 1:TH + 2, _PL:_PL + W, :] = jnp.zeros((1, W, Cin), xp_ref.dtype)

    @pl.when(s < n_s - 1)
    def _():
        xp_ref[TH + 1:TH + 2, _PL:_PL + W, :] = load_rows(row0 + TH, 1)

    # --- im2col over the strip -> ONE MXU dot with K = 9*Cin ---------------------
    # Taps slice the scratch ref directly (no whole-scratch load-then-slice).
    taps = [
        xp_ref[dy:dy + TH, _PL - 1 + dx:_PL - 1 + dx + W, :].reshape(TH * W, Cin)
        for dy in range(3) for dx in range(3)
    ]
    patch = jnp.concatenate(taps, axis=1).astype(MXU_DTYPE)       # (TH*W, 9*Cin) bf16
    y = jnp.dot(patch, w_ref[...],
                preferred_element_type=jnp.float32)               # (TH*W, Cout) f32

    # Lane-dense store; (B, H*W, C) -> (B, H, W, C) reshape is free at HBM level.
    y_ref[0] = y.astype(y_ref.dtype)

    # Fused BatchNorm training-mode partial statistics (f32).
    stat_ref[0, 0, 0:1, :] = jnp.sum(y, axis=0, keepdims=True)
    stat_ref[0, 0, 1:2, :] = jnp.sum(y * y, axis=0, keepdims=True)


def fused_conv_bn_stats(x_nhwc, w_mat, scale, shift, *, apply_act, row_strip):
    """3x3 same conv (no bias, bf16 MXU / f32 acc) with optional fused input BN+ReLU,
    row-strip tiled, emitting per-(batch, strip) BN partial statistics."""
    B, H, W, Cin = x_nhwc.shape
    Cout = w_mat.shape[1]
    TH = row_strip
    assert H % TH == 0, (H, TH)
    assert TH == H or (TH * W) % 8 == 0, (TH, W)   # keep output strip sublane-aligned
    S = H // TH

    kernel = functools.partial(_conv_bn_kernel, apply_act, TH)
    return pl.pallas_call(
        kernel,
        out_shape=(jax.ShapeDtypeStruct((B, H * W, Cout), jnp.float32),
                   jax.ShapeDtypeStruct((B, S, 2, Cout), jnp.float32)),
        grid=(B, S),
        in_specs=[
            pl.BlockSpec((1, H, W, Cin), lambda b, s: (b, 0, 0, 0)),
            pl.BlockSpec((9 * Cin, Cout), lambda b, s: (0, 0)),
            pl.BlockSpec((1, Cin), lambda b, s: (0, 0)),
            pl.BlockSpec((1, Cin), lambda b, s: (0, 0)),
        ],
        out_specs=(pl.BlockSpec((1, TH * W, Cout), lambda b, s: (b, s, 0)),
                   pl.BlockSpec((1, 1, 2, Cout), lambda b, s: (b, s, 0, 0))),
        scratch_shapes=[pltpu.VMEM((TH + 2, W + _PL + 2, Cin), jnp.float32)],
        # Default scoped-VMEM limit is plenty at these tile sizes.  At real UNet sizes
        # budget per generation: larger TH + vmem_limit_bytes up toward ~96 MiB on
        # v5e/v6e (128 MiB physical), roughly half-size tiles and <= ~56 MiB on v7x
        # (64 MiB physical), counting double-buffered in/out tiles + weights + scratch.
        compiler_params=pltpu.CompilerParams(
            dimension_semantics=("parallel", "parallel")),
    )(x_nhwc, w_mat, scale, shift)


# ----------------------------------------------------------------------------
# DoubleConv forward.
# ----------------------------------------------------------------------------
def _to_mat(w):
    # PyTorch OIHW (Cout, Cin, 3, 3) -> (9*Cin, Cout), rows ordered (dy, dx, cin).
    co, ci, kh, kw = w.shape
    return jnp.transpose(w, (2, 3, 1, 0)).reshape(kh * kw * ci, co).astype(MXU_DTYPE)


def _finalize_bn(stats, count, gamma, beta, eps):
    # stats: (B, S, 2, C) per-(batch, strip) partial [sum, sum of squares].
    s = jnp.sum(stats[:, :, 0, :], axis=(0, 1))        # (C,)
    q = jnp.sum(stats[:, :, 1, :], axis=(0, 1))
    mean = s / count
    var = q / count - mean * mean                      # biased variance (PyTorch BN)
    scale = gamma / jnp.sqrt(var + eps)
    shift = beta - mean * scale
    return (scale.reshape(1, -1).astype(jnp.float32),
            shift.reshape(1, -1).astype(jnp.float32))


def _pick_row_strip(H, W):
    # Target ~256-512 im2col rows per strip; must divide H and keep TH*W
    # sublane-aligned unless the strip is the whole image.
    th = min(H, max(1, 512 // max(W, 1)))
    while th > 1 and (H % th != 0 or (th * W) % 8 != 0):
        th -= 1
    return max(th, 1)


def double_conv_forward_nhwc(x_nhwc, params, eps=1e-5, row_strip=None):
    """Layout-stable NHWC entry point (use this inside an NHWC UNet)."""
    w1, g1, b1, w2, g2, b2 = params
    B, H, W, Cin = x_nhwc.shape
    C1, C2 = w1.shape[0], w2.shape[0]
    n = float(B * H * W)
    if row_strip is None:
        row_strip = _pick_row_strip(H, W)

    x = x_nhwc.astype(jnp.float32)
    ident_scale = jnp.ones((1, Cin), jnp.float32)
    ident_shift = jnp.zeros((1, Cin), jnp.float32)

    # Block 1: conv1 + BN1 partial stats. BN1+ReLU is applied lazily inside conv2.
    y1, st1 = fused_conv_bn_stats(x, _to_mat(w1), ident_scale, ident_shift,
                                  apply_act=False, row_strip=row_strip)
    scale1, shift1 = _finalize_bn(st1, n, g1, b1, eps)

    # Block 2: conv2 consumes relu(bn1(y1)) fused into its load path; emits BN2 stats.
    y1_nhwc = y1.reshape(B, H, W, C1)                  # free HBM-level reshape
    y2, st2 = fused_conv_bn_stats(y1_nhwc, _to_mat(w2), scale1, shift1,
                                  apply_act=True, row_strip=row_strip)
    scale2, shift2 = _finalize_bn(st2, n, g2, b2, eps)

    # Final BN2 + ReLU epilogue in plain jnp: XLA fuses it into whatever consumes the
    # block output (e.g. the NHWC->NCHW transpose below), avoiding an extra HBM pass
    # and masked partial stores for C2 < 128.
    out = jnp.maximum(y2 * scale2.reshape(1, 1, C2) + shift2.reshape(1, 1, C2), 0.0)
    return out.reshape(B, H, W, C2)


def double_conv_forward(x_nchw, params, eps=1e-5, row_strip=None):
    """PyTorch-interface wrapper: NCHW in / NCHW out.  In a full UNet, keep
    activations in NHWC and call double_conv_forward_nhwc directly so these two
    transposes amortize to the model boundary."""
    x = jnp.transpose(x_nchw, (0, 2, 3, 1))
    out = double_conv_forward_nhwc(x, params, eps=eps, row_strip=row_strip)
    return jnp.transpose(out, (0, 3, 1, 2))


# ----------------------------------------------------------------------------
# Pure-JAX reference (conv operands cast to conv_dtype, f32 accumulation) so the
# kernel's bf16-MXU path can be validated tightly.
# ----------------------------------------------------------------------------
def ref_double_conv(x_nchw, params, eps=1e-5, conv_dtype=jnp.float32):
    w1, g1, b1, w2, g2, b2 = params

    def conv(x, w):
        return jax.lax.conv_general_dilated(
            x.astype(conv_dtype), w.astype(conv_dtype),
            window_strides=(1, 1), padding=((1, 1), (1, 1)),
            dimension_numbers=("NCHW", "OIHW", "NCHW"),
            preferred_element_type=jnp.float32)

    def bnr(y, g, b):
        mean = jnp.mean(y, axis=(0, 2, 3), keepdims=True)
        var = jnp.mean((y - mean) ** 2, axis=(0, 2, 3), keepdims=True)
        yhat = (y - mean) / jnp.sqrt(var + eps)
        return jnp.maximum(yhat * g.reshape(1, -1, 1, 1) + b.reshape(1, -1, 1, 1), 0.0)

    y = bnr(conv(x_nchw, w1), g1, b1)
    return bnr(conv(y, w2), g2, b2)


if __name__ == "__main__":
    B, Cin, Cout, H, W = 2, 4, 8, 16, 16
    key = jax.random.PRNGKey(0)
    kx, kw1, kw2 = jax.random.split(key, 3)

    x = jax.random.normal(kx, (B, Cin, H, W), dtype=jnp.float32)
    # Deterministic synthetic parameters (Conv2d OIHW, no bias; BN gamma=1, beta=0).
    w1 = jax.random.normal(kw1, (Cout, Cin, 3, 3), dtype=jnp.float32) * 0.1
    w2 = jax.random.normal(kw2, (Cout, Cout, 3, 3), dtype=jnp.float32) * 0.1
    g1 = jnp.ones((Cout,), jnp.float32)
    b1 = jnp.zeros((Cout,), jnp.float32)
    g2 = jnp.ones((Cout,), jnp.float32)
    b2 = jnp.zeros((Cout,), jnp.float32)
    params = (w1, g1, b1, w2, g2, b2)

    # Matched-precision reference (bf16 conv operands, f32 accumulation & BN math).
    ref = jax.block_until_ready(ref_double_conv(x, params, conv_dtype=MXU_DTYPE))

    # Multi-strip path (exercises the top/bottom halo logic: H=16, TH=8 -> 2 strips).
    out_strips = jax.block_until_ready(double_conv_forward(x, params, row_strip=8))
    # Default strip choice (single strip at this toy size).
    out_default = jax.block_until_ready(double_conv_forward(x, params))

    assert out_strips.shape == (B, Cout, H, W), out_strips.shape
    assert out_default.shape == (B, Cout, H, W), out_default.shape
    err_s = float(jnp.max(jnp.abs(out_strips - ref)))
    err_d = float(jnp.max(jnp.abs(out_default - ref)))
    assert jnp.allclose(out_strips, ref, atol=3e-3, rtol=3e-3), err_s
    assert jnp.allclose(out_default, ref, atol=3e-3, rtol=3e-3), err_d
    print("KERNEL_OK")
</pallas_src>

<mosaic_0001>
module attributes {stable_mosaic.version = 11 : i64} {
  func.func @_conv_bn_kernel(%arg0: i32, %arg1: i32, %arg2: memref<1x16x16x4xf32, #tpu.memory_space<vmem>>, %arg3: memref<36x8xbf16, #tpu.memory_space<vmem>>, %arg4: memref<1x4xf32, #tpu.memory_space<vmem>>, %arg5: memref<1x4xf32, #tpu.memory_space<vmem>>, %arg6: memref<1x128x8xf32, #tpu.memory_space<vmem>>, %arg7: memref<1x1x2x8xf32, #tpu.memory_space<vmem>>, %arg8: memref<10x26x4xf32, #tpu.memory_space<vmem>>) attributes {dimension_semantics = [#tpu.dimension_semantics<parallel>, #tpu.dimension_semantics<parallel>], iteration_bounds = array<i64: 2, 2>, scalar_prefetch = 0 : i64, scratch_operands = 1 : i64, tpu.core_type = #tpu.core_type<tc>, window_params = [{transform_indices = @transform_0, window_bounds = array<i64: 1, 16, 16, 4>}, {pipeline_mode = #tpu.pipeline_mode<synchronous>, transform_indices = @transform_1, window_bounds = array<i64: 36, 8>}, {pipeline_mode = #tpu.pipeline_mode<synchronous>, transform_indices = @transform_2, window_bounds = array<i64: 1, 4>}, {pipeline_mode = #tpu.pipeline_mode<synchronous>, transform_indices = @transform_3, window_bounds = array<i64: 1, 4>}, {transform_indices = @transform_4, window_bounds = array<i64: 1, 128, 8>}, {transform_indices = @transform_5, window_bounds = array<i64: 1, 1, 2, 8>}]} {
    %c8_i32 = arith.constant 8 : i32
    %0 = arith.muli %arg1, %c8_i32 : i32
    %1 = tpu.assume_multiple %0, 8 : i32
    %c0 = arith.constant 0 : index
    %2 = arith.index_cast %1 : i32 to index
    %c0_0 = arith.constant 0 : index
    %c0_1 = arith.constant 0 : index
    %3 = vector.load %arg2[%c0, %2, %c0_0, %c0_1] : memref<1x16x16x4xf32, #tpu.memory_space<vmem>>, vector<1x8x16x4xf32>
    %4 = vector.shape_cast %3 : vector<1x8x16x4xf32> to vector<8x16x4xf32>
    %c1 = arith.constant 1 : index
    %c8 = arith.constant 8 : index
    %c0_2 = arith.constant 0 : index
    %5 = vector.load %arg8[%c1, %c8, %c0_2] : memref<10x26x4xf32, #tpu.memory_space<vmem>>, vector<8x16x4xf32>
    tpu.vector_store %arg8[%c1, %c8, %c0_2], %4 {strides = array<i32>} : memref<10x26x4xf32, #tpu.memory_space<vmem>>, vector<8x16x4xf32>,
    %cst = arith.constant 0.000000e+00 : f32
    %6 = vector.broadcast %cst : f32 to vector<10x1x4xf32>
    %c0_3 = arith.constant 0 : index
    %c7 = arith.constant 7 : index
    %c0_4 = arith.constant 0 : index
    %7 = vector.load %arg8[%c0_3, %c7, %c0_4] : memref<10x26x4xf32, #tpu.memory_space<vmem>>, vector<10x1x4xf32>
    tpu.vector_store %arg8[%c0_3, %c7, %c0_4], %6 {strides = array<i32>} : memref<10x26x4xf32, #tpu.memory_space<vmem>>, vector<10x1x4xf32>,
    %cst_5 = arith.constant 0.000000e+00 : f32
    %8 = vector.broadcast %cst_5 : f32 to vector<10x1x4xf32>
    %c0_6 = arith.constant 0 : index
    %c24 = arith.constant 24 : index
    %c0_7 = arith.constant 0 : index
    %9 = vector.load %arg8[%c0_6, %c24, %c0_7] : memref<10x26x4xf32, #tpu.memory_space<vmem>>, vector<10x1x4xf32>
    tpu.vector_store %arg8[%c0_6, %c24, %c0_7], %8 {strides = array<i32>} : memref<10x26x4xf32, #tpu.memory_space<vmem>>, vector<10x1x4xf32>,
    %c0_i32 = arith.constant 0 : i32
    %10 = arith.cmpi eq, %arg1, %c0_i32 : i32
    %11 = arith.extui %10 : i1 to i32
    %c0_i32_8 = arith.constant 0 : i32
    %12 = arith.cmpi ne, %11, %c0_i32_8 : i32
    scf.if %12 {
      %cst_55 = arith.constant 0.000000e+00 : f32
      %58 = vector.broadcast %cst_55 : f32 to vector<1x16x4xf32>
      %c0_56 = arith.constant 0 : index
      %c8_57 = arith.constant 8 : index
      %c0_58 = arith.constant 0 : index
      %59 = vector.load %arg8[%c0_56, %c8_57, %c0_58] : memref<10x26x4xf32, #tpu.memory_space<vmem>>, vector<1x16x4xf32>
      tpu.vector_store %arg8[%c0_56, %c8_57, %c0_58], %58 {strides = array<i32>} : memref<10x26x4xf32, #tpu.memory_space<vmem>>, vector<1x16x4xf32>,
    } else {
    }
    %c0_i32_9 = arith.constant 0 : i32
    %13 = arith.cmpi sgt, %arg1, %c0_i32_9 : i32
    %14 = arith.extui %13 : i1 to i32
    %c0_i32_10 = arith.constant 0 : i32
    %15 = arith.cmpi ne, %14, %c0_i32_10 : i32
    scf.if %15 {
      %c1_i32_55 = arith.constant 1 : i32
      %58 = arith.subi %1, %c1_i32_55 : i32
      %c0_56 = arith.constant 0 : index
      %59 = arith.index_cast %58 : i32 to index
      %c0_57 = arith.constant 0 : index
      %c0_58 = arith.constant 0 : index
      %60 = vector.load %arg2[%c0_56, %59, %c0_57, %c0_58] : memref<1x16x16x4xf32, #tpu.memory_space<vmem>>, vector<1x1x16x4xf32>
      %61 = vector.shape_cast %60 : vector<1x1x16x4xf32> to vector<1x16x4xf32>
      %c0_59 = arith.constant 0 : index
      %c8_60 = arith.constant 8 : index
      %c0_61 = arith.constant 0 : index
      %62 = vector.load %arg8[%c0_59, %c8_60, %c0_61] : memref<10x26x4xf32, #tpu.memory_space<vmem>>, vector<1x16x4xf32>
      tpu.vector_store %arg8[%c0_59, %c8_60, %c0_61], %61 {strides = array<i32>} : memref<10x26x4xf32, #tpu.memory_space<vmem>>, vector<1x16x4xf32>,
    } else {
    }
    %c1_i32 = arith.constant 1 : i32
    %16 = arith.cmpi eq, %arg1, %c1_i32 : i32
    %17 = arith.extui %16 : i1 to i32
    %c0_i32_11 = arith.constant 0 : i32
    %18 = arith.cmpi ne, %17, %c0_i32_11 : i32
    scf.if %18 {
      %cst_55 = arith.constant 0.000000e+00 : f32
      %58 = vector.broadcast %cst_55 : f32 to vector<1x16x4xf32>
      %c9_56 = arith.constant 9 : index
      %c8_57 = arith.constant 8 : index
      %c0_58 = arith.constant 0 : index
      %59 = vector.load %arg8[%c9_56, %c8_57, %c0_58] : memref<10x26x4xf32, #tpu.memory_space<vmem>>, vector<1x16x4xf32>
      tpu.vector_store %arg8[%c9_56, %c8_57, %c0_58], %58 {strides = array<i32>} : memref<10x26x4xf32, #tpu.memory_space<vmem>>, vector<1x16x4xf32>,
    } else {
    }
    %c1_i32_12 = arith.constant 1 : i32
    %19 = arith.cmpi slt, %arg1, %c1_i32_12 : i32
    %20 = arith.extui %19 : i1 to i32
    %c0_i32_13 = arith.constant 0 : i32
    %21 = arith.cmpi ne, %20, %c0_i32_13 : i32
    scf.if %21 {
      %c8_i32_55 = arith.constant 8 : i32
      %58 = arith.addi %1, %c8_i32_55 : i32
      %c0_56 = arith.constant 0 : index
      %59 = arith.index_cast %58 : i32 to index
      %c0_57 = arith.constant 0 : index
      %c0_58 = arith.constant 0 : index
      %60 = vector.load %arg2[%c0_56, %59, %c0_57, %c0_58] : memref<1x16x16x4xf32, #tpu.memory_space<vmem>>, vector<1x1x16x4xf32>
      %61 = vector.shape_cast %60 : vector<1x1x16x4xf32> to vector<1x16x4xf32>
      %c9_59 = arith.constant 9 : index
      %c8_60 = arith.constant 8 : index
      %c0_61 = arith.constant 0 : index
      %62 = vector.load %arg8[%c9_59, %c8_60, %c0_61] : memref<10x26x4xf32, #tpu.memory_space<vmem>>, vector<1x16x4xf32>
      tpu.vector_store %arg8[%c9_59, %c8_60, %c0_61], %61 {strides = array<i32>} : memref<10x26x4xf32, #tpu.memory_space<vmem>>, vector<1x16x4xf32>,
    } else {
    }
    %c0_14 = arith.constant 0 : index
    %c7_15 = arith.constant 7 : index
    %c0_16 = arith.constant 0 : index
    %22 = vector.load %arg8[%c0_14, %c7_15, %c0_16] : memref<10x26x4xf32, #tpu.memory_space<vmem>>, vector<8x16x4xf32>
    %23 = vector.shape_cast %22 : vector<8x16x4xf32> to vector<128x4xf32>
    %c0_17 = arith.constant 0 : index
    %c8_18 = arith.constant 8 : index
    %c0_19 = arith.constant 0 : index
    %24 = vector.load %arg8[%c0_17, %c8_18, %c0_19] : memref<10x26x4xf32, #tpu.memory_space<vmem>>, vector<8x16x4xf32>
    %25 = vector.shape_cast %24 : vector<8x16x4xf32> to vector<128x4xf32>
    %c0_20 = arith.constant 0 : index
    %c9 = arith.constant 9 : index
    %c0_21 = arith.constant 0 : index
    %26 = vector.load %arg8[%c0_20, %c9, %c0_21] : memref<10x26x4xf32, #tpu.memory_space<vmem>>, vector<8x16x4xf32>
    %27 = vector.shape_cast %26 : vector<8x16x4xf32> to vector<128x4xf32>
    %c1_22 = arith.constant 1 : index
    %c7_23 = arith.constant 7 : index
    %c0_24 = arith.constant 0 : index
    %28 = vector.load %arg8[%c1_22, %c7_23, %c0_24] : memref<10x26x4xf32, #tpu.memory_space<vmem>>, vector<8x16x4xf32>
    %29 = vector.shape_cast %28 : vector<8x16x4xf32> to vector<128x4xf32>
    %c1_25 = arith.constant 1 : index
    %c8_26 = arith.constant 8 : index
    %c0_27 = arith.constant 0 : index
    %30 = vector.load %arg8[%c1_25, %c8_26, %c0_27] : memref<10x26x4xf32, #tpu.memory_space<vmem>>, vector<8x16x4xf32>
    %31 = vector.shape_cast %30 : vector<8x16x4xf32> to vector<128x4xf32>
    %c1_28 = arith.constant 1 : index
    %c9_29 = arith.constant 9 : index
    %c0_30 = arith.constant 0 : index
    %32 = vector.load %arg8[%c1_28, %c9_29, %c0_30] : memref<10x26x4xf32, #tpu.memory_space<vmem>>, vector<8x16x4xf32>
    %33 = vector.shape_cast %32 : vector<8x16x4xf32> to vector<128x4xf32>
    %c2 = arith.constant 2 : index
    %c7_31 = arith.constant 7 : index
    %c0_32 = arith.constant 0 : index
    %34 = vector.load %arg8[%c2, %c7_31, %c0_32] : memref<10x26x4xf32, #tpu.memory_space<vmem>>, vector<8x16x4xf32>
    %35 = vector.shape_cast %34 : vector<8x16x4xf32> to vector<128x4xf32>
    %c2_33 = arith.constant 2 : index
    %c8_34 = arith.constant 8 : index
    %c0_35 = arith.constant 0 : index
    %36 = vector.load %arg8[%c2_33, %c8_34, %c0_35] : memref<10x26x4xf32, #tpu.memory_space<vmem>>, vector<8x16x4xf32>
    %37 = vector.shape_cast %36 : vector<8x16x4xf32> to vector<128x4xf32>
    %c2_36 = arith.constant 2 : index
    %c9_37 = arith.constant 9 : index
    %c0_38 = arith.constant 0 : index
    %38 = vector.load %arg8[%c2_36, %c9_37, %c0_38] : memref<10x26x4xf32, #tpu.memory_space<vmem>>, vector<8x16x4xf32>
    %39 = vector.shape_cast %38 : vector<8x16x4xf32> to vector<128x4xf32>
    %40 = tpu.concatenate %23, %25, %27, %29, %31, %33, %35, %37, %39 in 1 : vector<128x4xf32>, vector<128x4xf32>, vector<128x4xf32>, vector<128x4xf32>, vector<128x4xf32>, vector<128x4xf32>, vector<128x4xf32>, vector<128x4xf32>, vector<128x4xf32> -> vector<128x36xf32>
    %41 = arith.truncf %40 : vector<128x36xf32> to vector<128x36xbf16>
    %c0_39 = arith.constant 0 : index
    %c0_40 = arith.constant 0 : index
    %42 = vector.load %arg3[%c0_39, %c0_40] : memref<36x8xbf16, #tpu.memory_space<vmem>>, vector<36x8xbf16>
    %cst_41 = arith.constant dense<0.000000e+00> : vector<128x8xf32>
    %43 = tpu.matmul %41, %42, %cst_41 {dimension_numbers = #tpu.dot_dimension_numbers<[1], [0], [0], [1], [0, 0, 1, 1], [], []>} : vector<128x36xbf16>, vector<36x8xbf16>, vector<128x8xf32> -> vector<128x8xf32>
    %c0_42 = arith.constant 0 : index
    %c0_43 = arith.constant 0 : index
    %c0_44 = arith.constant 0 : index
    %44 = vector.load %arg6[%c0_42, %c0_43, %c0_44] : memref<1x128x8xf32, #tpu.memory_space<vmem>>, vector<1x128x8xf32>
    %45 = vector.shape_cast %44 : vector<1x128x8xf32> to vector<128x8xf32>
    %46 = vector.shape_cast %43 : vector<128x8xf32> to vector<1x128x8xf32>
    tpu.vector_store %arg6[%c0_42, %c0_43, %c0_44], %46 {strides = array<i32>} : memref<1x128x8xf32, #tpu.memory_space<vmem>>, vector<1x128x8xf32>,
    %cst_45 = arith.constant dense<0.000000e+00> : vector<8xf32>
    %47 = vector.multi_reduction <add>, %43, %cst_45 [0] : vector<128x8xf32> to vector<8xf32>
    %48 = vector.shape_cast %47 : vector<8xf32> to vector<1x8xf32>
    %c0_46 = arith.constant 0 : index
    %c0_47 = arith.constant 0 : index
    %c0_48 = arith.constant 0 : index
    %c0_49 = arith.constant 0 : index
    %49 = vector.load %arg7[%c0_46, %c0_47, %c0_48, %c0_49] : memref<1x1x2x8xf32, #tpu.memory_space<vmem>>, vector<1x1x1x8xf32>
    %50 = vector.shape_cast %49 : vector<1x1x1x8xf32> to vector<1x8xf32>
    %51 = vector.shape_cast %48 : vector<1x8xf32> to vector<1x1x1x8xf32>
    tpu.vector_store %arg7[%c0_46, %c0_47, %c0_48, %c0_49], %51 {strides = array<i32>} : memref<1x1x2x8xf32, #tpu.memory_space<vmem>>, vector<1x1x1x8xf32>,
    %52 = arith.mulf %43, %43 : vector<128x8xf32>
    %cst_50 = arith.constant dense<0.000000e+00> : vector<8xf32>
    %53 = vector.multi_reduction <add>, %52, %cst_50 [0] : vector<128x8xf32> to vector<8xf32>
    %54 = vector.shape_cast %53 : vector<8xf32> to vector<1x8xf32>
    %c0_51 = arith.constant 0 : index
    %c0_52 = arith.constant 0 : index
    %c1_53 = arith.constant 1 : index
    %c0_54 = arith.constant 0 : index
    %55 = vector.load %arg7[%c0_51, %c0_52, %c1_53, %c0_54] : memref<1x1x2x8xf32, #tpu.memory_space<vmem>>, vector<1x1x1x8xf32>
    %56 = vector.shape_cast %55 : vector<1x1x1x8xf32> to vector<1x8xf32>
    %57 = vector.shape_cast %54 : vector<1x8xf32> to vector<1x1x1x8xf32>
    tpu.vector_store %arg7[%c0_51, %c0_52, %c1_53, %c0_54], %57 {strides = array<i32>} : memref<1x1x2x8xf32, #tpu.memory_space<vmem>>, vector<1x1x1x8xf32>,
    return
  }
  func.func @transform_0(%arg0: i32, %arg1: i32) -> (i32, i32, i32, i32) {
    %c0_i32 = arith.constant 0 : i32
    %c0_i32_0 = arith.constant 0 : i32
    %c0_i32_1 = arith.constant 0 : i32
    %c0_i32_2 = arith.constant 0 : i32
    return %arg0, %c0_i32, %c0_i32_0, %c0_i32_1 : i32, i32, i32, i32
  }
  func.func @transform_1(%arg0: i32, %arg1: i32) -> (i32, i32) {
    %c0_i32 = arith.constant 0 : i32
    %c0_i32_0 = arith.constant 0 : i32
    %c0_i32_1 = arith.constant 0 : i32
    return %c0_i32, %c0_i32_0 : i32, i32
  }
  func.func @transform_2(%arg0: i32, %arg1: i32) -> (i32, i32) {
    %c0_i32 = arith.constant 0 : i32
    %c0_i32_0 = arith.constant 0 : i32
    %c0_i32_1 = arith.constant 0 : i32
    return %c0_i32, %c0_i32_0 : i32, i32
  }
  func.func @transform_3(%arg0: i32, %arg1: i32) -> (i32, i32) {
    %c0_i32 = arith.constant 0 : i32
    %c0_i32_0 = arith.constant 0 : i32
    %c0_i32_1 = arith.constant 0 : i32
    return %c0_i32, %c0_i32_0 : i32, i32
  }
  func.func @transform_4(%arg0: i32, %arg1: i32) -> (i32, i32, i32) {
    %c0_i32 = arith.constant 0 : i32
    %c0_i32_0 = arith.constant 0 : i32
    return %arg0, %arg1, %c0_i32 : i32, i32, i32
  }
  func.func @transform_5(%arg0: i32, %arg1: i32) -> (i32, i32, i32, i32) {
    %c0_i32 = arith.constant 0 : i32
    %c0_i32_0 = arith.constant 0 : i32
    %c0_i32_1 = arith.constant 0 : i32
    return %arg0, %arg1, %c0_i32, %c0_i32_0 : i32, i32, i32, i32
  }
}

</mosaic_0001>

<llo_original>
// kernel: tpu_custom_call.1
$region0: #{tpu_custom_call.1}
  #allocation0 [shape = 'u32[]', space=smem, size = 0x4, offset = 0x4, fixed_abs, tag = 'smem constant byte address 0x4 - core index']
  #allocation1 [shape = 'u32[72,128]{1,0:T(1,128)}', space=vmem, size = 0x9000, scoped, tag = 'internal scratch']
  #allocation2 [shape = 'f32[10,26,4]{2,1,0:T(8,128)}', space=vmem, size = 0x28000, scoped, tag = 'scratch operand']
  %s0 = inlined_call_operand.vmem [shape: f32[2,16,16,4], index: 0, kind: input, shape index: {}]
  %s1 = inlined_call_operand.vmem [shape: bf16[36,8], index: 1, kind: input, shape index: {}]
  %s2 = inlined_call_operand.vmem [shape: f32[1,4], index: 2, kind: input, shape index: {}]
  %s3 = inlined_call_operand.vmem [shape: f32[1,4], index: 3, kind: input, shape index: {}]
  %s4 = inlined_call_operand.vmem [shape: f32[2,256,8], index: 4, kind: output, shape index: {0}]
  %s5 = inlined_call_operand.hbm [shape: f32[2,2,2,8], index: 5, kind: output, shape index: {1}]
  %6 = xla_tuple %s4, %s5
  %s7 = sld [smem:[#allocation0]]
  $region73: #{tpu_custom_call.1} parent=0
    _
  %s9 = ssub.s32 1, %s7
  %s10 = scalar_select 0, %s9, %s7
  $region1: #{tpu_custom_call.1} parent=0
    #allocation3 [shape = 'u8[2048]{0}', space=vmem, size = 0x800, scoped, tag = 'output window, operand 1']
    #allocation4 [shape = 's32[2]{0}', space=sflag, size = 0x8, scoped, tag = 'scoped memory for tpu_custom_call.1']
    %11 = vsyncpa [#allocation4], 0
    %s12 = scalar_lea.sflag [#allocation4], 1
    %13 = vsyncpa %s12, 0
    loop: start=0, step=1, limit=6
    $region2: #{tpu_custom_call.1} parent=1 // loop_pre_header
      _
    $region3: #{tpu_custom_call.1} parent=1 // loop_header
      %s15 = sphi 0, %s19
      %p16 = scmp.ge.s32.totalorder %s15, 6
      %s22 = sphi 0, %s34
      %s23 = sphi 0, %s30
      %s24 = sphi 0, %s22
      %s25 = sphi 0, %s23
      %s26 = sphi 0, %s24
      %s27 = sphi 0, %s25
      %s37 = sphi 0, %s39
      %s40 = sphi 0, %s37
      %s41 = sphi 0, %s40
      %s57 = sphi 0, %s41
      %s61 = sphi 0, %s61
      %s63 = sphi 0, %s61
      %s64 = sphi 0, %s63
      %s78 = sphi 0, %s64
      %s82 = sphi 0, %s82
      %s84 = sphi 0, %s82
      %s85 = sphi 0, %s84
      %s99 = sphi 0, %s85
      %s103 = sphi 0, %s103
      %s105 = sphi 0, %s103
      %s106 = sphi 0, %s105
      %s120 = sphi 0, %s106
      %s128 = sphi 0, %s130
      %s131 = sphi 0, %s128
      %s132 = sphi 0, %s131
      %s148 = sphi 0, %s132
      %s156 = sphi 0, %s158
      %s159 = sphi 0, %s156
      %s160 = sphi 0, %s159
      %s176 = sphi 0, %s160
    $region4: #{tpu_custom_call.1} parent=1 // loop_header_branch
      %18 = sbr.rel (%p16) target = $region8
    $region5: #{tpu_custom_call.1} parent=1 // loop_body
      %s20 = ssub.s32 %s15, 1
      %s21 = ssub.s32 %s15, 2
      %s28 = sadd.s32 1, %s23
      %p29 = scmp.ge.s32.totalorder %s28, 2
      %s30 = scalar_select %p29, 0, %s28
      %s31 = sadd.s32 1, %s22
      %s32 = scalar_select %p29, %s31, %s22
      %p33 = scmp.ge.s32.totalorder %s32, 2
      %s34 = scalar_select %p33, 0, %s32
      %s35 = ssub.s32 %s22, %s34
      %p36 = scmp.eq.s32.totalorder %s35, 0
      %s38 = sadd.s32 %s37, 1
      %s39 = scalar_select %p36, %s37, %s38
      %p42 = pneg %p36
      %p43 = scmp.eq.s32.totalorder %s15, 3
      %p44 = por %p42, %p43
      %p45 = scmp.ne.s32.totalorder %s37, %s40
      %p46 = scmp.eq.s32.totalorder %s15, 0
      %p47 = por %p45, %p46
      %p48 = scmp.ne.s32.totalorder %s37, %s40
      %p49 = scmp.eq.s32.totalorder %s20, 3
      %p50 = por %p48, %p49
      %p51 = scmp.ne.s32.totalorder %s40, %s41
      %p52 = scmp.eq.s32.totalorder %s20, 0
      %p53 = por %p51, %p52
      %p54 = scmp.ne.s32.totalorder %s40, %s41
      %p55 = scmp.eq.s32.totalorder %s21, 3
      %p56 = por %p54, %p55
      %p58 = scmp.ne.s32.totalorder %s41, %s57
      %p59 = scmp.eq.s32.totalorder %s21, 0
      %p60 = por %p58, %p59
      %s62 = sadd.s32 %s61, 1
      %p65 = scmp.eq.s32.totalorder %s15, 3
      %p66 = scmp.ne.s32.totalorder %s61, %s63
      %p67 = scmp.eq.s32.totalorder %s15, 0
      %p68 = por %p66, %p67
      %p69 = scmp.ne.s32.totalorder %s61, %s63
      %p70 = scmp.eq.s32.totalorder %s20, 3
      %p71 = por %p69, %p70
      %p72 = scmp.ne.s32.totalorder %s63, %s64
      %p73 = scmp.eq.s32.totalorder %s20, 0
      %p74 = por %p72, %p73
      %p75 = scmp.ne.s32.totalorder %s63, %s64
      %p76 = scmp.eq.s32.totalorder %s21, 3
      %p77 = por %p75, %p76
      %p79 = scmp.ne.s32.totalorder %s64, %s78
      %p80 = scmp.eq.s32.totalorder %s21, 0
      %p81 = por %p79, %p80
      %s83 = sadd.s32 %s82, 1
      %p86 = scmp.eq.s32.totalorder %s15, 3
      %p87 = scmp.ne.s32.totalorder %s82, %s84
      %p88 = scmp.eq.s32.totalorder %s15, 0
      %p89 = por %p87, %p88
      %p90 = scmp.ne.s32.totalorder %s82, %s84
      %p91 = scmp.eq.s32.totalorder %s20, 3
      %p92 = por %p90, %p91
      %p93 = scmp.ne.s32.totalorder %s84, %s85
      %p94 = scmp.eq.s32.totalorder %s20, 0
      %p95 = por %p93, %p94
      %p96 = scmp.ne.s32.totalorder %s84, %s85
      %p97 = scmp.eq.s32.totalorder %s21, 3
      %p98 = por %p96, %p97
      %p100 = scmp.ne.s32.totalorder %s85, %s99
      %p101 = scmp.eq.s32.totalorder %s21, 0
      %p102 = por %p100, %p101
      %s104 = sadd.s32 %s103, 1
      %p107 = scmp.eq.s32.totalorder %s15, 3
      %p108 = scmp.ne.s32.totalorder %s103, %s105
      %p109 = scmp.eq.s32.totalorder %s15, 0
      %p110 = por %p108, %p109
      %p111 = scmp.ne.s32.totalorder %s103, %s105
      %p112 = scmp.eq.s32.totalorder %s20, 3
      %p113 = por %p111, %p112
      %p114 = scmp.ne.s32.totalorder %s105, %s106
      %p115 = scmp.eq.s32.totalorder %s20, 0
      %p116 = por %p114, %p115
      %p117 = scmp.ne.s32.totalorder %s105, %s106
      %p118 = scmp.eq.s32.totalorder %s21, 3
      %p119 = por %p117, %p118
      %p121 = scmp.ne.s32.totalorder %s106, %s120
      %p122 = scmp.eq.s32.totalorder %s21, 0
      %p123 = por %p121, %p122
      %s124 = ssub.s32 %s22, %s34
      %s125 = ssub.s32 %s23, %s30
      %s126 = sor.u32 %s124, %s125
      %p127 = scmp.eq.s32.totalorder %s126, 0
      %s129 = sadd.s32 %s128, 1
      %s130 = scalar_select %p127, %s128, %s129
      %p133 = pneg %p127
      %p134 = scmp.eq.s32.totalorder %s15, 3
      %p135 = por %p133, %p134
      %p136 = scmp.ne.s32.totalorder %s128, %s131
      %p137 = scmp.eq.s32.totalorder %s15, 0
      %p138 = por %p136, %p137
      %p139 = scmp.ne.s32.totalorder %s128, %s131
      %p140 = scmp.eq.s32.totalorder %s20, 3
      %p141 = por %p139, %p140
      %p142 = scmp.ne.s32.totalorder %s131, %s132
      %p143 = scmp.eq.s32.totalorder %s20, 0
      %p144 = por %p142, %p143
      %p145 = scmp.ne.s32.totalorder %s131, %s132
      %p146 = scmp.eq.s32.totalorder %s21, 3
      %p147 = por %p145, %p146
      %p149 = scmp.ne.s32.totalorder %s132, %s148
      %p150 = scmp.eq.s32.totalorder %s21, 0
      %p151 = por %p149, %p150
      %s152 = ssub.s32 %s22, %s34
      %s153 = ssub.s32 %s23, %s30
      %s154 = sor.u32 %s152, %s153
      %p155 = scmp.eq.s32.totalorder %s154, 0
      %s157 = sadd.s32 %s156, 1
      %s158 = scalar_select %p155, %s156, %s157
      %p161 = pneg %p155
      %p162 = scmp.eq.s32.totalorder %s15, 3
      %p163 = por %p161, %p162
      %p164 = scmp.ne.s32.totalorder %s156, %s159
      %p165 = scmp.eq.s32.totalorder %s15, 0
      %p166 = por %p164, %p165
      %p167 = scmp.ne.s32.totalorder %s156, %s159
      %p168 = scmp.eq.s32.totalorder %s20, 3
      %p169 = por %p167, %p168
      %p170 = scmp.ne.s32.totalorder %s159, %s160
      %p171 = scmp.eq.s32.totalorder %s20, 0
      %p172 = por %p170, %p171
      %p173 = scmp.ne.s32.totalorder %s159, %s160
      %p174 = scmp.eq.s32.totalorder %s21, 3
      %p175 = por %p173, %p174
      %p177 = scmp.ne.s32.totalorder %s160, %s176
      %p178 = scmp.eq.s32.totalorder %s21, 0
      %p179 = por %p177, %p178
      %p180 = scmp.le.s32.totalorder 1, %s15
      %p181 = scmp.lt.s32.totalorder %s15, 5
      %p182 = pnand %p180, %p181
      %p183 = pneg %p182
      // Predicated region
      $region9: #{tpu_custom_call.1} parent=5 // pred_check
        _
      $region10: #{tpu_custom_call.1} parent=5 // pred_check_branch
        %185 = sbr.rel (%p182) target = $region12
      $region11: #{tpu_custom_call.1} parent=5 // pred_region
        %s186 = ssub.s32 %s15, 1
        // Predicated region
        $region13: #{tpu_custom_call.1} parent=11 // pred_check
          %p187 = pneg %p74
        $region14: #{tpu_custom_call.1} parent=11 // pred_check_branch
          %189 = sbr.rel (%p187) target = $region16
        $region15: #{tpu_custom_call.1} parent=11 // pred_region
          _
        $region16: #{tpu_custom_call.1} parent=11 // pred_fallthru
          _
        // Predicated region
        $region17: #{tpu_custom_call.1} parent=11 // pred_check
          %p190 = pneg %p95
        $region18: #{tpu_custom_call.1} parent=11 // pred_check_branch
          %192 = sbr.rel (%p190) target = $region20
        $region19: #{tpu_custom_call.1} parent=11 // pred_region
          _
        $region20: #{tpu_custom_call.1} parent=11 // pred_fallthru
          _
        // Predicated region
        $region21: #{tpu_custom_call.1} parent=11 // pred_check
          %p193 = pneg %p116
        $region22: #{tpu_custom_call.1} parent=11 // pred_check_branch
          %195 = sbr.rel (%p193) target = $region24
        $region23: #{tpu_custom_call.1} parent=11 // pred_region
          _
        $region24: #{tpu_custom_call.1} parent=11 // pred_fallthru
          _
      $region12: #{tpu_custom_call.1} parent=5 // pred_fallthru
        _
      %p196 = scmp.lt.s32.totalorder %s15, 4
      // Predicated region
      $region25: #{tpu_custom_call.1} parent=5 // pred_check
        %p197 = pneg %p196
      $region26: #{tpu_custom_call.1} parent=5 // pred_check_branch
        %199 = sbr.rel (%p197) target = $region28
      $region27: #{tpu_custom_call.1} parent=5 // pred_region
        // Predicated region
        $region29: #{tpu_custom_call.1} parent=27 // pred_check
          %p200 = pneg %p47
        $region30: #{tpu_custom_call.1} parent=27 // pred_check_branch
          %202 = sbr.rel (%p200) target = $region32
        $region31: #{tpu_custom_call.1} parent=27 // pred_region
          %p203 = scmp.lt.s32.totalorder %s22, 1
          %s204 = scalar_select %p203, %s22, 1
          %s205 = smul.addr %s204, 32
          %s206 = smul.addr %s205, 8
          %s207 = scalar_lea.vmem %s0, %s206
        $region32: #{tpu_custom_call.1} parent=27 // pred_fallthru
          _
      $region28: #{tpu_custom_call.1} parent=5 // pred_fallthru
        _
      %p208 = scmp.le.s32.totalorder 1, %s15
      %p209 = scmp.lt.s32.totalorder %s15, 5
      %p210 = pnand %p208, %p209
      %p211 = pneg %p210
      // Predicated region
      $region33: #{tpu_custom_call.1} parent=5 // pred_check
        _
      $region34: #{tpu_custom_call.1} parent=5 // pred_check_branch
        %213 = sbr.rel (%p210) target = $region36
      $region35: #{tpu_custom_call.1} parent=5 // pred_region
        %s214 = ssub.s32 %s15, 1
        %p215 = scmp.lt.s32.totalorder %s24, 1
        %s216 = scalar_select %p215, %s24, 1
        %s217 = smul.addr %s216, 32
        %s218 = smul.addr %s217, 8
        %s219 = scalar_lea.vmem %s0, %s218
        %p220 = pneg %p53
        %p221 = pneg %p50
        %p222 = pneg %p74
        %p223 = pneg %p71
        %p224 = pneg %p95
        %p225 = pneg %p92
        %p226 = pneg %p116
        %p227 = pneg %p113
        %p228 = pneg %p144
        %p229 = pneg %p141
        %s230 = smul.u32 16, %s25
        %p231 = scmp.lt.s32.totalorder %s24, 1
        %s232 = scalar_select %p231, %s24, 1
        %p233 = scmp.lt.s32.totalorder %s230, 31
        %s234 = scalar_select %p233, %s230, 31
        %s235 = smul.addr %s232, 32
        %s236 = sadd.s32 %s234, %s235
        %s237 = smul.addr %s236, 8
        %s238 = scalar_lea.vmem %s4, %s237
        %p239 = pneg %p172
        %p240 = pneg %p169
        %s241 = sand.u32 %s159, 1
        %s242 = scalar_lea.sflag [#allocation4], %s241
        %s243 = sand.u32 %s159, 1
        %s244 = smul.addr %s243, 2
        %s245 = scalar_lea.vmem [#allocation3], %s244
        %p246 = scmp.lt.s32.totalorder %s24, 1
        %s247 = scalar_select %p246, %s24, 1
        %s248 = smul.addr %s247, 32
        %s249 = smul.addr %s248, 8
        %s250 = scalar_lea.vmem %s0, %s249
        %s251 = smul.u32 16, %s25
        %p252 = scmp.lt.s32.totalorder %s24, 1
        %s253 = scalar_select %p252, %s24, 1
        %p254 = scmp.lt.s32.totalorder %s251, 31
        %s255 = scalar_select %p254, %s251, 31
        %s256 = smul.addr %s253, 32
        %s257 = sadd.s32 %s255, %s256
        %s258 = smul.addr %s257, 8
        %s259 = scalar_lea.vmem %s4, %s258
        %s260 = smul.u32 16, %s25
        %s262 = smul.u32 %s25, 8
        %s263 = smul.u32 %s262, 16
        %s264 = scalar_lea.vmem %s250, %s263
        %v265 = vld [vmem:[%s264] sm:$0xff]
        %v266 = vld [vmem:[%s264 + $0x8] sm:$0xff]
        %v267 = vld [vmem:[%s264 + $0x10] sm:$0xff]
        %v268 = vld [vmem:[%s264 + $0x18] sm:$0xff]
        %v269 = vld [vmem:[%s264 + $0x20] sm:$0xff]
        %v270 = vld [vmem:[%s264 + $0x28] sm:$0xff]
        %v271 = vld [vmem:[%s264 + $0x30] sm:$0xff]
        %v272 = vld [vmem:[%s264 + $0x38] sm:$0xff]
        %v273 = vld [vmem:[%s264 + $0x40] sm:$0xff]
        %v274 = vld [vmem:[%s264 + $0x48] sm:$0xff]
        %v275 = vld [vmem:[%s264 + $0x50] sm:$0xff]
        %v276 = vld [vmem:[%s264 + $0x58] sm:$0xff]
        %v277 = vld [vmem:[%s264 + $0x60] sm:$0xff]
        %v278 = vld [vmem:[%s264 + $0x68] sm:$0xff]
        %v279 = vld [vmem:[%s264 + $0x70] sm:$0xff]
        %v280 = vld [vmem:[%s264 + $0x78] sm:$0xff]
        %s281 = scalar_lea.vmem [#allocation2], 32
        %vm282 = vcmask 31744
        %283 = vst.msk [vmem:[%s281 + $0x8] sm:$0xff] %vm282, %v265
        %284 = vst.msk [vmem:[%s281 + $0x10] sm:$0xff] %vm282, %v266
        %285 = vst.msk [vmem:[%s281 + $0x28] sm:$0xff] %vm282, %v267
        %286 = vst.msk [vmem:[%s281 + $0x30] sm:$0xff] %vm282, %v268
        %287 = vst.msk [vmem:[%s281 + $0x48] sm:$0xff] %vm282, %v269
        %288 = vst.msk [vmem:[%s281 + $0x50] sm:$0xff] %vm282, %v270
        %289 = vst.msk [vmem:[%s281 + $0x68] sm:$0xff] %vm282, %v271
        %290 = vst.msk [vmem:[%s281 + $0x70] sm:$0xff] %vm282, %v272
        %291 = vst.msk [vmem:[%s281 + $0x88] sm:$0xff] %vm282, %v273
        %292 = vst.msk [vmem:[%s281 + $0x90] sm:$0xff] %vm282, %v274
        %293 = vst.msk [vmem:[%s281 + $0xa8] sm:$0xff] %vm282, %v275
        %294 = vst.msk [vmem:[%s281 + $0xb0] sm:$0xff] %vm282, %v276
        %295 = vst.msk [vmem:[%s281 + $0xc8] sm:$0xff] %vm282, %v277
        %296 = vst.msk [vmem:[%s281 + $0xd0] sm:$0xff] %vm282, %v278
        %297 = vst.msk [vmem:[%s281 + $0xe8] sm:$0xff] %vm282, %v279
        %298 = vst.msk [vmem:[%s281 + $0xf0] sm:$0xff] %vm282, %v280
        %vm299 = vcmask 24576
        %300 = vst.msk [vmem:[#allocation2 + $0x7] sm:$0x1] %vm299, 0.0
        %301 = vst.msk [vmem:[#allocation2 + $0x27] sm:$0x1] %vm299, 0.0
        %302 = vst.msk [vmem:[#allocation2 + $0x47] sm:$0x1] %vm299, 0.0
        %303 = vst.msk [vmem:[#allocation2 + $0x67] sm:$0x1] %vm299, 0.0
        %304 = vst.msk [vmem:[#allocation2 + $0x87] sm:$0x1] %vm299, 0.0
        %305 = vst.msk [vmem:[#allocation2 + $0xa7] sm:$0x1] %vm299, 0.0
        %306 = vst.msk [vmem:[#allocation2 + $0xc7] sm:$0x1] %vm299, 0.0
        %307 = vst.msk [vmem:[#allocation2 + $0xe7] sm:$0x1] %vm299, 0.0
        %308 = vst.msk [vmem:[#allocation2 + $0x107] sm:$0x1] %vm299, 0.0
        %309 = vst.msk [vmem:[#allocation2 + $0x127] sm:$0x1] %vm299, 0.0
        %310 = vst.msk [vmem:[#allocation2 + $0x18] sm:$0x1] %vm299, 0.0
        %311 = vst.msk [vmem:[#allocation2 + $0x38] sm:$0x1] %vm299, 0.0
        %312 = vst.msk [vmem:[#allocation2 + $0x58] sm:$0x1] %vm299, 0.0
        %313 = vst.msk [vmem:[#allocation2 + $0x78] sm:$0x1] %vm299, 0.0
        %314 = vst.msk [vmem:[#allocation2 + $0x98] sm:$0x1] %vm299, 0.0
        %315 = vst.msk [vmem:[#allocation2 + $0xb8] sm:$0x1] %vm299, 0.0
        %316 = vst.msk [vmem:[#allocation2 + $0xd8] sm:$0x1] %vm299, 0.0
        %317 = vst.msk [vmem:[#allocation2 + $0xf8] sm:$0x1] %vm299, 0.0
        %318 = vst.msk [vmem:[#allocation2 + $0x118] sm:$0x1] %vm299, 0.0
        %319 = vst.msk [vmem:[#allocation2 + $0x138] sm:$0x1] %vm299, 0.0
        %p320 = scmp.eq.s32.totalorder %s25, 0
        // Predicated region
        $region37: #{tpu_custom_call.1} parent=35 // pred_check
          %p321 = pneg %p320
        $region38: #{tpu_custom_call.1} parent=35 // pred_check_branch
          %323 = sbr.rel (%p321) target = $region40
        $region39: #{tpu_custom_call.1} parent=35 // pred_region
          %324 = vst.msk [vmem:[#allocation2 + $0x8] sm:$0xff] %vm282, 0.0
          %325 = vst.msk [vmem:[#allocation2 + $0x10] sm:$0xff] %vm282, 0.0
        $region40: #{tpu_custom_call.1} parent=35 // pred_fallthru
          _
        %p326 = scmp.gt.s32.totalorder %s25, 0
        // Predicated region
        $region41: #{tpu_custom_call.1} parent=35 // pred_check
          %p327 = pneg %p326
        $region42: #{tpu_custom_call.1} parent=35 // pred_check_branch
          %329 = sbr.rel (%p327) target = $region44
        $region43: #{tpu_custom_call.1} parent=35 // pred_region
          %s330 = ssub.s32 %s262, 1
          %s331 = smul.u32 %s330, 16
          %s332 = scalar_lea.vmem %s250, %s331
          %v333 = vld [vmem:[%s332] sm:$0xff]
          %v334 = vld [vmem:[%s332 + $0x8] sm:$0xff]
          %335 = vst.msk [vmem:[#allocation2 + $0x8] sm:$0xff] %vm282, %v333
          %336 = vst.msk [vmem:[#allocation2 + $0x10] sm:$0xff] %vm282, %v334
        $region44: #{tpu_custom_call.1} parent=35 // pred_fallthru
          _
        %p337 = scmp.eq.s32.totalorder %s25, 1
        // Predicated region
        $region45: #{tpu_custom_call.1} parent=35 // pred_check
          %p338 = pneg %p337
        $region46: #{tpu_custom_call.1} parent=35 // pred_check_branch
          %340 = sbr.rel (%p338) target = $region48
        $region47: #{tpu_custom_call.1} parent=35 // pred_region
          %s341 = scalar_lea.vmem [#allocation2], 288
          %342 = vst.msk [vmem:[%s341 + $0x8] sm:$0xff] %vm282, 0.0
          %343 = vst.msk [vmem:[%s341 + $0x10] sm:$0xff] %vm282, 0.0
        $region48: #{tpu_custom_call.1} parent=35 // pred_fallthru
          _
        %p344 = scmp.lt.s32.totalorder %s25, 1
        // Predicated region
        $region49: #{tpu_custom_call.1} parent=35 // pred_check
          %p345 = pneg %p344
        $region50: #{tpu_custom_call.1} parent=35 // pred_check_branch
          %347 = sbr.rel (%p345) target = $region52
        $region51: #{tpu_custom_call.1} parent=35 // pred_region
          %s348 = sadd.s32 %s262, 8
          %s349 = smul.u32 %s348, 16
          %s350 = scalar_lea.vmem %s250, %s349
          %v351 = vld [vmem:[%s350] sm:$0xff]
          %v352 = vld [vmem:[%s350 + $0x8] sm:$0xff]
          %s353 = scalar_lea.vmem [#allocation2], 288
          %354 = vst.msk [vmem:[%s353 + $0x8] sm:$0xff] %vm282, %v351
          %355 = vst.msk [vmem:[%s353 + $0x10] sm:$0xff] %vm282, %v352
        $region52: #{tpu_custom_call.1} parent=35 // pred_fallthru
          _
        %v356 = vld [vmem:[#allocation2 + $0x7] sm:$0xff]
        %v357 = vld [vmem:[#allocation2 + $0xf] sm:$0xff]
        %v358 = vld [vmem:[#allocation2 + $0x27] sm:$0xff]
        %v359 = vld [vmem:[#allocation2 + $0x2f] sm:$0xff]
        %v360 = vld [vmem:[#allocation2 + $0x47] sm:$0xff]
        %v361 = vld [vmem:[#allocation2 + $0x4f] sm:$0xff]
        %v362 = vld [vmem:[#allocation2 + $0x67] sm:$0xff]
        %v363 = vld [vmem:[#allocation2 + $0x6f] sm:$0xff]
        %v364 = vld [vmem:[#allocation2 + $0x87] sm:$0xff]
        %v365 = vld [vmem:[#allocation2 + $0x8f] sm:$0xff]
        %v366 = vld [vmem:[#allocation2 + $0xa7] sm:$0xff]
        %v367 = vld [vmem:[#allocation2 + $0xaf] sm:$0xff]
        %v368 = vld [vmem:[#allocation2 + $0xc7] sm:$0xff]
        %v369 = vld [vmem:[#allocation2 + $0xcf] sm:$0xff]
        %v370 = vld [vmem:[#allocation2 + $0xe7] sm:$0xff]
        %v371 = vld [vmem:[#allocation2 + $0xef] sm:$0xff]
        %v372 = vld [vmem:[#allocation2 + $0x8] sm:$0xff]
        %v373 = vld [vmem:[#allocation2 + $0x10] sm:$0xff]
        %v374 = vld [vmem:[#allocation2 + $0x28] sm:$0xff]
        %v375 = vld [vmem:[#allocation2 + $0x30] sm:$0xff]
        %v376 = vld [vmem:[#allocation2 + $0x48] sm:$0xff]
        %v377 = vld [vmem:[#allocation2 + $0x50] sm:$0xff]
        %v378 = vld [vmem:[#allocation2 + $0x68] sm:$0xff]
        %v379 = vld [vmem:[#allocation2 + $0x70] sm:$0xff]
        %v380 = vld [vmem:[#allocation2 + $0x88] sm:$0xff]
        %v381 = vld [vmem:[#allocation2 + $0x90] sm:$0xff]
        %v382 = vld [vmem:[#allocation2 + $0xa8] sm:$0xff]
        %v383 = vld [vmem:[#allocation2 + $0xb0] sm:$0xff]
        %v384 = vld [vmem:[#allocation2 + $0xc8] sm:$0xff]
        %v385 = vld [vmem:[#allocation2 + $0xd0] sm:$0xff]
        %v386 = vld [vmem:[#allocation2 + $0xe8] sm:$0xff]
        %v387 = vld [vmem:[#allocation2 + $0xf0] sm:$0xff]
        %v388 = vld [vmem:[#allocation2 + $0x9] sm:$0xff]
        %v389 = vld [vmem:[#allocation2 + $0x11] sm:$0xff]
        %v390 = vld [vmem:[#allocation2 + $0x29] sm:$0xff]
        %v391 = vld [vmem:[#allocation2 + $0x31] sm:$0xff]
        %v392 = vld [vmem:[#allocation2 + $0x49] sm:$0xff]
        %v393 = vld [vmem:[#allocation2 + $0x51] sm:$0xff]
        %v394 = vld [vmem:[#allocation2 + $0x69] sm:$0xff]
        %v395 = vld [vmem:[#allocation2 + $0x71] sm:$0xff]
        %v396 = vld [vmem:[#allocation2 + $0x89] sm:$0xff]
        %v397 = vld [vmem:[#allocation2 + $0x91] sm:$0xff]
        %v398 = vld [vmem:[#allocation2 + $0xa9] sm:$0xff]
        %v399 = vld [vmem:[#allocation2 + $0xb1] sm:$0xff]
        %v400 = vld [vmem:[#allocation2 + $0xc9] sm:$0xff]
        %v401 = vld [vmem:[#allocation2 + $0xd1] sm:$0xff]
        %v402 = vld [vmem:[#allocation2 + $0xe9] sm:$0xff]
        %v403 = vld [vmem:[#allocation2 + $0xf1] sm:$0xff]
        %v404 = vld [vmem:[%s281 + $0x7] sm:$0xff]
        %v405 = vld [vmem:[%s281 + $0xf] sm:$0xff]
        %v406 = vld [vmem:[%s281 + $0x27] sm:$0xff]
        %v407 = vld [vmem:[%s281 + $0x2f] sm:$0xff]
        %v408 = vld [vmem:[%s281 + $0x47] sm:$0xff]
        %v409 = vld [vmem:[%s281 + $0x4f] sm:$0xff]
        %v410 = vld [vmem:[%s281 + $0x67] sm:$0xff]
        %v411 = vld [vmem:[%s281 + $0x6f] sm:$0xff]
        %v412 = vld [vmem:[%s281 + $0x87] sm:$0xff]
        %v413 = vld [vmem:[%s281 + $0x8f] sm:$0xff]
        %v414 = vld [vmem:[%s281 + $0xa7] sm:$0xff]
        %v415 = vld [vmem:[%s281 + $0xaf] sm:$0xff]
        %v416 = vld [vmem:[%s281 + $0xc7] sm:$0xff]
        %v417 = vld [vmem:[%s281 + $0xcf] sm:$0xff]
        %v418 = vld [vmem:[%s281 + $0xe7] sm:$0xff]
        %v419 = vld [vmem:[%s281 + $0xef] sm:$0xff]
        %v420 = vld [vmem:[%s281 + $0x8] sm:$0xff]
        %v421 = vld [vmem:[%s281 + $0x10] sm:$0xff]
        %v422 = vld [vmem:[%s281 + $0x28] sm:$0xff]
        %v423 = vld [vmem:[%s281 + $0x30] sm:$0xff]
        %v424 = vld [vmem:[%s281 + $0x48] sm:$0xff]
        %v425 = vld [vmem:[%s281 + $0x50] sm:$0xff]
        %v426 = vld [vmem:[%s281 + $0x68] sm:$0xff]
        %v427 = vld [vmem:[%s281 + $0x70] sm:$0xff]
        %v428 = vld [vmem:[%s281 + $0x88] sm:$0xff]
        %v429 = vld [vmem:[%s281 + $0x90] sm:$0xff]
        %v430 = vld [vmem:[%s281 + $0xa8] sm:$0xff]
        %v431 = vld [vmem:[%s281 + $0xb0] sm:$0xff]
        %v432 = vld [vmem:[%s281 + $0xc8] sm:$0xff]
        %v433 = vld [vmem:[%s281 + $0xd0] sm:$0xff]
        %v434 = vld [vmem:[%s281 + $0xe8] sm:$0xff]
        %v435 = vld [vmem:[%s281 + $0xf0] sm:$0xff]
        %v436 = vld [vmem:[%s281 + $0x9] sm:$0xff]
        %v437 = vld [vmem:[%s281 + $0x11] sm:$0xff]
        %v438 = vld [vmem:[%s281 + $0x29] sm:$0xff]
        %v439 = vld [vmem:[%s281 + $0x31] sm:$0xff]
        %v440 = vld [vmem:[%s281 + $0x49] sm:$0xff]
        %v441 = vld [vmem:[%s281 + $0x51] sm:$0xff]
        %v442 = vld [vmem:[%s281 + $0x69] sm:$0xff]
        %v443 = vld [vmem:[%s281 + $0x71] sm:$0xff]
        %v444 = vld [vmem:[%s281 + $0x89] sm:$0xff]
        %v445 = vld [vmem:[%s281 + $0x91] sm:$0xff]
        %v446 = vld [vmem:[%s281 + $0xa9] sm:$0xff]
        %v447 = vld [vmem:[%s281 + $0xb1] sm:$0xff]
        %v448 = vld [vmem:[%s281 + $0xc9] sm:$0xff]
        %v449 = vld [vmem:[%s281 + $0xd1] sm:$0xff]
        %v450 = vld [vmem:[%s281 + $0xe9] sm:$0xff]
        %v451 = vld [vmem:[%s281 + $0xf1] sm:$0xff]
        %s452 = scalar_lea.vmem [#allocation2], 64
        %v453 = vld [vmem:[%s452 + $0x7] sm:$0xff]
        %v454 = vld [vmem:[%s452 + $0xf] sm:$0xff]
        %v455 = vld [vmem:[%s452 + $0x27] sm:$0xff]
        %v456 = vld [vmem:[%s452 + $0x2f] sm:$0xff]
        %v457 = vld [vmem:[%s452 + $0x47] sm:$0xff]
        %v458 = vld [vmem:[%s452 + $0x4f] sm:$0xff]
        %v459 = vld [vmem:[%s452 + $0x67] sm:$0xff]
        %v460 = vld [vmem:[%s452 + $0x6f] sm:$0xff]
        %v461 = vld [vmem:[%s452 + $0x87] sm:$0xff]
        %v462 = vld [vmem:[%s452 + $0x8f] sm:$0xff]
        %v463 = vld [vmem:[%s452 + $0xa7] sm:$0xff]
        %v464 = vld [vmem:[%s452 + $0xaf] sm:$0xff]
        %v465 = vld [vmem:[%s452 + $0xc7] sm:$0xff]
        %v466 = vld [vmem:[%s452 + $0xcf] sm:$0xff]
        %v467 = vld [vmem:[%s452 + $0xe7] sm:$0xff]
        %v468 = vld [vmem:[%s452 + $0xef] sm:$0xff]
        %v469 = vld [vmem:[%s452 + $0x8] sm:$0xff]
        %v470 = vld [vmem:[%s452 + $0x10] sm:$0xff]
        %v471 = vld [vmem:[%s452 + $0x28] sm:$0xff]
        %v472 = vld [vmem:[%s452 + $0x30] sm:$0xff]
        %v473 = vld [vmem:[%s452 + $0x48] sm:$0xff]
        %v474 = vld [vmem:[%s452 + $0x50] sm:$0xff]
        %v475 = vld [vmem:[%s452 + $0x68] sm:$0xff]
        %v476 = vld [vmem:[%s452 + $0x70] sm:$0xff]
        %v477 = vld [vmem:[%s452 + $0x88] sm:$0xff]
        %v478 = vld [vmem:[%s452 + $0x90] sm:$0xff]
        %v479 = vld [vmem:[%s452 + $0xa8] sm:$0xff]
        %v480 = vld [vmem:[%s452 + $0xb0] sm:$0xff]
        %v481 = vld [vmem:[%s452 + $0xc8] sm:$0xff]
        %v482 = vld [vmem:[%s452 + $0xd0] sm:$0xff]
        %v483 = vld [vmem:[%s452 + $0xe8] sm:$0xff]
        %v484 = vld [vmem:[%s452 + $0xf0] sm:$0xff]
        %v485 = vld [vmem:[%s452 + $0x9] sm:$0xff]
        %v486 = vld [vmem:[%s452 + $0x11] sm:$0xff]
        %v487 = vld [vmem:[%s452 + $0x29] sm:$0xff]
        %v488 = vld [vmem:[%s452 + $0x31] sm:$0xff]
        %v489 = vld [vmem:[%s452 + $0x49] sm:$0xff]
        %v490 = vld [vmem:[%s452 + $0x51] sm:$0xff]
        %v491 = vld [vmem:[%s452 + $0x69] sm:$0xff]
        %v492 = vld [vmem:[%s452 + $0x71] sm:$0xff]
        %v493 = vld [vmem:[%s452 + $0x89] sm:$0xff]
        %v494 = vld [vmem:[%s452 + $0x91] sm:$0xff]
        %v495 = vld [vmem:[%s452 + $0xa9] sm:$0xff]
        %v496 = vld [vmem:[%s452 + $0xb1] sm:$0xff]
        %v497 = vld [vmem:[%s452 + $0xc9] sm:$0xff]
        %v498 = vld [vmem:[%s452 + $0xd1] sm:$0xff]
        %v499 = vld [vmem:[%s452 + $0xe9] sm:$0xff]
        %v500 = vld [vmem:[%s452 + $0xf1] sm:$0xff]
        %517 = vrot.lane.b32.xlu0 %v372, 4
        %v518 = vpop.permute.xlu0 %517
        %519 = vrot.lane.b32.xlu0 %v373, 4
        %v520 = vpop.permute.xlu0 %519
        %521 = vrot.lane.b32.xlu0 %v374, 4
        %v522 = vpop.permute.xlu0 %521
        %523 = vrot.lane.b32.xlu0 %v375, 4
        %v524 = vpop.permute.xlu0 %523
        %525 = vrot.lane.b32.xlu0 %v376, 4
        %v526 = vpop.permute.xlu0 %525
        %527 = vrot.lane.b32.xlu0 %v377, 4
        %v528 = vpop.permute.xlu0 %527
        %529 = vrot.lane.b32.xlu0 %v378, 4
        %v530 = vpop.permute.xlu0 %529
        %531 = vrot.lane.b32.xlu0 %v379, 4
        %v532 = vpop.permute.xlu0 %531
        %533 = vrot.lane.b32.xlu0 %v380, 4
        %v534 = vpop.permute.xlu0 %533
        %535 = vrot.lane.b32.xlu0 %v381, 4
        %v536 = vpop.permute.xlu0 %535
        %537 = vrot.lane.b32.xlu0 %v382, 4
        %v538 = vpop.permute.xlu0 %537
        %539 = vrot.lane.b32.xlu0 %v383, 4
        %v540 = vpop.permute.xlu0 %539
        %541 = vrot.lane.b32.xlu0 %v384, 4
        %v542 = vpop.permute.xlu0 %541
        %543 = vrot.lane.b32.xlu0 %v385, 4
        %v544 = vpop.permute.xlu0 %543
        %545 = vrot.lane.b32.xlu0 %v386, 4
        %v546 = vpop.permute.xlu0 %545
        %547 = vrot.lane.b32.xlu0 %v387, 4
        %v548 = vpop.permute.xlu0 %547
        %581 = vrot.lane.b32.xlu0 %v388, 8
        %v582 = vpop.permute.xlu0 %581
        %583 = vrot.lane.b32.xlu0 %v389, 8
        %v584 = vpop.permute.xlu0 %583
        %585 = vrot.lane.b32.xlu0 %v390, 8
        %v586 = vpop.permute.xlu0 %585
        %587 = vrot.lane.b32.xlu0 %v391, 8
        %v588 = vpop.permute.xlu0 %587
        %589 = vrot.lane.b32.xlu0 %v392, 8
        %v590 = vpop.permute.xlu0 %589
        %591 = vrot.lane.b32.xlu0 %v393, 8
        %v592 = vpop.permute.xlu0 %591
        %593 = vrot.lane.b32.xlu0 %v394, 8
        %v594 = vpop.permute.xlu0 %593
        %595 = vrot.lane.b32.xlu0 %v395, 8
        %v596 = vpop.permute.xlu0 %595
        %597 = vrot.lane.b32.xlu0 %v396, 8
        %v598 = vpop.permute.xlu0 %597
        %599 = vrot.lane.b32.xlu0 %v397, 8
        %v600 = vpop.permute.xlu0 %599
        %601 = vrot.lane.b32.xlu0 %v398, 8
        %v602 = vpop.permute.xlu0 %601
        %603 = vrot.lane.b32.xlu0 %v399, 8
        %v604 = vpop.permute.xlu0 %603
        %605 = vrot.lane.b32.xlu0 %v400, 8
        %v606 = vpop.permute.xlu0 %605
        %607 = vrot.lane.b32.xlu0 %v401, 8
        %v608 = vpop.permute.xlu0 %607
        %609 = vrot.lane.b32.xlu0 %v402, 8
        %v610 = vpop.permute.xlu0 %609
        %611 = vrot.lane.b32.xlu0 %v403, 8
        %v612 = vpop.permute.xlu0 %611
        %645 = vrot.lane.b32.xlu0 %v404, 12
        %v646 = vpop.permute.xlu0 %645
        %647 = vrot.lane.b32.xlu0 %v405, 12
        %v648 = vpop.permute.xlu0 %647
        %649 = vrot.lane.b32.xlu0 %v406, 12
        %v650 = vpop.permute.xlu0 %649
        %651 = vrot.lane.b32.xlu0 %v407, 12
        %v652 = vpop.permute.xlu0 %651
        %653 = vrot.lane.b32.xlu0 %v408, 12
        %v654 = vpop.permute.xlu0 %653
        %655 = vrot.lane.b32.xlu0 %v409, 12
        %v656 = vpop.permute.xlu0 %655
        %657 = vrot.lane.b32.xlu0 %v410, 12
        %v658 = vpop.permute.xlu0 %657
        %659 = vrot.lane.b32.xlu0 %v411, 12
        %v660 = vpop.permute.xlu0 %659
        %661 = vrot.lane.b32.xlu0 %v412, 12
        %v662 = vpop.permute.xlu0 %661
        %663 = vrot.lane.b32.xlu0 %v413, 12
        %v664 = vpop.permute.xlu0 %663
        %665 = vrot.lane.b32.xlu0 %v414, 12
        %v666 = vpop.permute.xlu0 %665
        %667 = vrot.lane.b32.xlu0 %v415, 12
        %v668 = vpop.permute.xlu0 %667
        %669 = vrot.lane.b32.xlu0 %v416, 12
        %v670 = vpop.permute.xlu0 %669
        %671 = vrot.lane.b32.xlu0 %v417, 12
        %v672 = vpop.permute.xlu0 %671
        %673 = vrot.lane.b32.xlu0 %v418, 12
        %v674 = vpop.permute.xlu0 %673
        %675 = vrot.lane.b32.xlu0 %v419, 12
        %v676 = vpop.permute.xlu0 %675
        %709 = vrot.lane.b32.xlu0 %v420, 16
        %v710 = vpop.permute.xlu0 %709
        %711 = vrot.lane.b32.xlu0 %v421, 16
        %v712 = vpop.permute.xlu0 %711
        %713 = vrot.lane.b32.xlu0 %v422, 16
        %v714 = vpop.permute.xlu0 %713
        %715 = vrot.lane.b32.xlu0 %v423, 16
        %v716 = vpop.permute.xlu0 %715
        %717 = vrot.lane.b32.xlu0 %v424, 16
        %v718 = vpop.permute.xlu0 %717
        %719 = vrot.lane.b32.xlu0 %v425, 16
        %v720 = vpop.permute.xlu0 %719
        %721 = vrot.lane.b32.xlu0 %v426, 16
        %v722 = vpop.permute.xlu0 %721
        %723 = vrot.lane.b32.xlu0 %v427, 16
        %v724 = vpop.permute.xlu0 %723
        %725 = vrot.lane.b32.xlu0 %v428, 16
        %v726 = vpop.permute.xlu0 %725
        %727 = vrot.lane.b32.xlu0 %v429, 16
        %v728 = vpop.permute.xlu0 %727
        %729 = vrot.lane.b32.xlu0 %v430, 16
        %v730 = vpop.permute.xlu0 %729
        %731 = vrot.lane.b32.xlu0 %v431, 16
        %v732 = vpop.permute.xlu0 %731
        %733 = vrot.lane.b32.xlu0 %v432, 16
        %v734 = vpop.permute.xlu0 %733
        %735 = vrot.lane.b32.xlu0 %v433, 16
        %v736 = vpop.permute.xlu0 %735
        %737 = vrot.lane.b32.xlu0 %v434, 16
        %v738 = vpop.permute.xlu0 %737
        %739 = vrot.lane.b32.xlu0 %v435, 16
        %v740 = vpop.permute.xlu0 %739
        %773 = vrot.lane.b32.xlu0 %v436, 20
        %v774 = vpop.permute.xlu0 %773
        %775 = vrot.lane.b32.xlu0 %v437, 20
        %v776 = vpop.permute.xlu0 %775
        %777 = vrot.lane.b32.xlu0 %v438, 20
        %v778 = vpop.permute.xlu0 %777
        %779 = vrot.lane.b32.xlu0 %v439, 20
        %v780 = vpop.permute.xlu0 %779
        %781 = vrot.lane.b32.xlu0 %v440, 20
        %v782 = vpop.permute.xlu0 %781
        %783 = vrot.lane.b32.xlu0 %v441, 20
        %v784 = vpop.permute.xlu0 %783
        %785 = vrot.lane.b32.xlu0 %v442, 20
        %v786 = vpop.permute.xlu0 %785
        %787 = vrot.lane.b32.xlu0 %v443, 20
        %v788 = vpop.permute.xlu0 %787
        %789 = vrot.lane.b32.xlu0 %v444, 20
        %v790 = vpop.permute.xlu0 %789
        %791 = vrot.lane.b32.xlu0 %v445, 20
        %v792 = vpop.permute.xlu0 %791
        %793 = vrot.lane.b32.xlu0 %v446, 20
        %v794 = vpop.permute.xlu0 %793
        %795 = vrot.lane.b32.xlu0 %v447, 20
        %v796 = vpop.permute.xlu0 %795
        %797 = vrot.lane.b32.xlu0 %v448, 20
        %v798 = vpop.permute.xlu0 %797
        %799 = vrot.lane.b32.xlu0 %v449, 20
        %v800 = vpop.permute.xlu0 %799
        %801 = vrot.lane.b32.xlu0 %v450, 20
        %v802 = vpop.permute.xlu0 %801
        %803 = vrot.lane.b32.xlu0 %v451, 20
        %v804 = vpop.permute.xlu0 %803
        %837 = vrot.lane.b32.xlu0 %v453, 24
        %v838 = vpop.permute.xlu0 %837
        %839 = vrot.lane.b32.xlu0 %v454, 24
        %v840 = vpop.permute.xlu0 %839
        %841 = vrot.lane.b32.xlu0 %v455, 24
        %v842 = vpop.permute.xlu0 %841
        %843 = vrot.lane.b32.xlu0 %v456, 24
        %v844 = vpop.permute.xlu0 %843
        %845 = vrot.lane.b32.xlu0 %v457, 24
        %v846 = vpop.permute.xlu0 %845
        %847 = vrot.lane.b32.xlu0 %v458, 24
        %v848 = vpop.permute.xlu0 %847
        %849 = vrot.lane.b32.xlu0 %v459, 24
        %v850 = vpop.permute.xlu0 %849
        %851 = vrot.lane.b32.xlu0 %v460, 24
        %v852 = vpop.permute.xlu0 %851
        %853 = vrot.lane.b32.xlu0 %v461, 24
        %v854 = vpop.permute.xlu0 %853
        %855 = vrot.lane.b32.xlu0 %v462, 24
        %v856 = vpop.permute.xlu0 %855
        %857 = vrot.lane.b32.xlu0 %v463, 24
        %v858 = vpop.permute.xlu0 %857
        %859 = vrot.lane.b32.xlu0 %v464, 24
        %v860 = vpop.permute.xlu0 %859
        %861 = vrot.lane.b32.xlu0 %v465, 24
        %v862 = vpop.permute.xlu0 %861
        %863 = vrot.lane.b32.xlu0 %v466, 24
        %v864 = vpop.permute.xlu0 %863
        %865 = vrot.lane.b32.xlu0 %v467, 24
        %v866 = vpop.permute.xlu0 %865
        %867 = vrot.lane.b32.xlu0 %v468, 24
        %v868 = vpop.permute.xlu0 %867
        %901 = vrot.lane.b32.xlu0 %v469, 28
        %v902 = vpop.permute.xlu0 %901
        %903 = vrot.lane.b32.xlu0 %v470, 28
        %v904 = vpop.permute.xlu0 %903
        %905 = vrot.lane.b32.xlu0 %v471, 28
        %v906 = vpop.permute.xlu0 %905
        %907 = vrot.lane.b32.xlu0 %v472, 28
        %v908 = vpop.permute.xlu0 %907
        %909 = vrot.lane.b32.xlu0 %v473, 28
        %v910 = vpop.permute.xlu0 %909
        %911 = vrot.lane.b32.xlu0 %v474, 28
        %v912 = vpop.permute.xlu0 %911
        %913 = vrot.lane.b32.xlu0 %v475, 28
        %v914 = vpop.permute.xlu0 %913
        %915 = vrot.lane.b32.xlu0 %v476, 28
        %v916 = vpop.permute.xlu0 %915
        %917 = vrot.lane.b32.xlu0 %v477, 28
        %v918 = vpop.permute.xlu0 %917
        %919 = vrot.lane.b32.xlu0 %v478, 28
        %v920 = vpop.permute.xlu0 %919
        %921 = vrot.lane.b32.xlu0 %v479, 28
        %v922 = vpop.permute.xlu0 %921
        %923 = vrot.lane.b32.xlu0 %v480, 28
        %v924 = vpop.permute.xlu0 %923
        %925 = vrot.lane.b32.xlu0 %v481, 28
        %v926 = vpop.permute.xlu0 %925
        %927 = vrot.lane.b32.xlu0 %v482, 28
        %v928 = vpop.permute.xlu0 %927
        %929 = vrot.lane.b32.xlu0 %v483, 28
        %v930 = vpop.permute.xlu0 %929
        %931 = vrot.lane.b32.xlu0 %v484, 28
        %v932 = vpop.permute.xlu0 %931
        %965 = vrot.lane.b32.xlu0 %v485, 32
        %v966 = vpop.permute.xlu0 %965
        %967 = vrot.lane.b32.xlu0 %v486, 32
        %v968 = vpop.permute.xlu0 %967
        %969 = vrot.lane.b32.xlu0 %v487, 32
        %v970 = vpop.permute.xlu0 %969
        %971 = vrot.lane.b32.xlu0 %v488, 32
        %v972 = vpop.permute.xlu0 %971
        %973 = vrot.lane.b32.xlu0 %v489, 32
        %v974 = vpop.permute.xlu0 %973
        %975 = vrot.lane.b32.xlu0 %v490, 32
        %v976 = vpop.permute.xlu0 %975
        %977 = vrot.lane.b32.xlu0 %v491, 32
        %v978 = vpop.permute.xlu0 %977
        %979 = vrot.lane.b32.xlu0 %v492, 32
        %v980 = vpop.permute.xlu0 %979
        %981 = vrot.lane.b32.xlu0 %v493, 32
        %v982 = vpop.permute.xlu0 %981
        %983 = vrot.lane.b32.xlu0 %v494, 32
        %v984 = vpop.permute.xlu0 %983
        %985 = vrot.lane.b32.xlu0 %v495, 32
        %v986 = vpop.permute.xlu0 %985
        %987 = vrot.lane.b32.xlu0 %v496, 32
        %v988 = vpop.permute.xlu0 %987
        %989 = vrot.lane.b32.xlu0 %v497, 32
        %v990 = vpop.permute.xlu0 %989
        %991 = vrot.lane.b32.xlu0 %v498, 32
        %v992 = vpop.permute.xlu0 %991
        %993 = vrot.lane.b32.xlu0 %v499, 32
        %v994 = vpop.permute.xlu0 %993
        %995 = vrot.lane.b32.xlu0 %v500, 32
        %v996 = vpop.permute.xlu0 %995
        %v1013 = vsel %vm282, %v356, %v518
        %v1014 = vsel %vm282, %v357, %v520
        %v1015 = vsel %vm282, %v358, %v522
        %v1016 = vsel %vm282, %v359, %v524
        %v1017 = vsel %vm282, %v360, %v526
        %v1018 = vsel %vm282, %v361, %v528
        %v1019 = vsel %vm282, %v362, %v530
        %v1020 = vsel %vm282, %v363, %v532
        %v1021 = vsel %vm282, %v364, %v534
        %v1022 = vsel %vm282, %v365, %v536
        %v1023 = vsel %vm282, %v366, %v538
        %v1024 = vsel %vm282, %v367, %v540
        %v1025 = vsel %vm282, %v368, %v542
        %v1026 = vsel %vm282, %v369, %v544
        %v1027 = vsel %vm282, %v370, %v546
        %v1028 = vsel %vm282, %v371, %v548
        %vm1029 = vcmask 64512
        %v1030 = vsel %vm1029, %v1013, %v582
        %v1031 = vsel %vm1029, %v1014, %v584
        %v1032 = vsel %vm1029, %v1015, %v586
        %v1033 = vsel %vm1029, %v1016, %v588
        %v1034 = vsel %vm1029, %v1017, %v590
        %v1035 = vsel %vm1029, %v1018, %v592
        %v1036 = vsel %vm1029, %v1019, %v594
        %v1037 = vsel %vm1029, %v1020, %v596
        %v1038 = vsel %vm1029, %v1021, %v598
        %v1039 = vsel %vm1029, %v1022, %v600
        %v1040 = vsel %vm1029, %v1023, %v602
        %v1041 = vsel %vm1029, %v1024, %v604
        %v1042 = vsel %vm1029, %v1025, %v606
        %v1043 = vsel %vm1029, %v1026, %v608
        %v1044 = vsel %vm1029, %v1027, %v610
        %v1045 = vsel %vm1029, %v1028, %v612
        %vm1046 = vcmask 97280
        %v1047 = vsel %vm1046, %v1030, %v646
        %v1048 = vsel %vm1046, %v1031, %v648
        %v1049 = vsel %vm1046, %v1032, %v650
        %v1050 = vsel %vm1046, %v1033, %v652
        %v1051 = vsel %vm1046, %v1034, %v654
        %v1052 = vsel %vm1046, %v1035, %v656
        %v1053 = vsel %vm1046, %v1036, %v658
        %v1054 = vsel %vm1046, %v1037, %v660
        %v1055 = vsel %vm1046, %v1038, %v662
        %v1056 = vsel %vm1046, %v1039, %v664
        %v1057 = vsel %vm1046, %v1040, %v666
        %v1058 = vsel %vm1046, %v1041, %v668
        %v1059 = vsel %vm1046, %v1042, %v670
        %v1060 = vsel %vm1046, %v1043, %v672
        %v1061 = vsel %vm1046, %v1044, %v674
        %v1062 = vsel %vm1046, %v1045, %v676
        %vm1063 = vcmask 130048
        %v1064 = vsel %vm1063, %v1047, %v710
        %v1065 = vsel %vm1063, %v1048, %v712
        %v1066 = vsel %vm1063, %v1049, %v714
        %v1067 = vsel %vm1063, %v1050, %v716
        %v1068 = vsel %vm1063, %v1051, %v718
        %v1069 = vsel %vm1063, %v1052, %v720
        %v1070 = vsel %vm1063, %v1053, %v722
        %v1071 = vsel %vm1063, %v1054, %v724
        %v1072 = vsel %vm1063, %v1055, %v726
        %v1073 = vsel %vm1063, %v1056, %v728
        %v1074 = vsel %vm1063, %v1057, %v730
        %v1075 = vsel %vm1063, %v1058, %v732
        %v1076 = vsel %vm1063, %v1059, %v734
        %v1077 = vsel %vm1063, %v1060, %v736
        %v1078 = vsel %vm1063, %v1061, %v738
        %v1079 = vsel %vm1063, %v1062, %v740
        %vm1080 = vcmask 162816
        %v1081 = vsel %vm1080, %v1064, %v774
        %v1082 = vsel %vm1080, %v1065, %v776
        %v1083 = vsel %vm1080, %v1066, %v778
        %v1084 = vsel %vm1080, %v1067, %v780
        %v1085 = vsel %vm1080, %v1068, %v782
        %v1086 = vsel %vm1080, %v1069, %v784
        %v1087 = vsel %vm1080, %v1070, %v786
        %v1088 = vsel %vm1080, %v1071, %v788
        %v1089 = vsel %vm1080, %v1072, %v790
        %v1090 = vsel %vm1080, %v1073, %v792
        %v1091 = vsel %vm1080, %v1074, %v794
        %v1092 = vsel %vm1080, %v1075, %v796
        %v1093 = vsel %vm1080, %v1076, %v798
        %v1094 = vsel %vm1080, %v1077, %v800
        %v1095 = vsel %vm1080, %v1078, %v802
        %v1096 = vsel %vm1080, %v1079, %v804
        %vm1097 = vcmask 195584
        %v1098 = vsel %vm1097, %v1081, %v838
        %v1099 = vsel %vm1097, %v1082, %v840
        %v1100 = vsel %vm1097, %v1083, %v842
        %v1101 = vsel %vm1097, %v1084, %v844
        %v1102 = vsel %vm1097, %v1085, %v846
        %v1103 = vsel %vm1097, %v1086, %v848
        %v1104 = vsel %vm1097, %v1087, %v850
        %v1105 = vsel %vm1097, %v1088, %v852
        %v1106 = vsel %vm1097, %v1089, %v854
        %v1107 = vsel %vm1097, %v1090, %v856
        %v1108 = vsel %vm1097, %v1091, %v858
        %v1109 = vsel %vm1097, %v1092, %v860
        %v1110 = vsel %vm1097, %v1093, %v862
        %v1111 = vsel %vm1097, %v1094, %v864
        %v1112 = vsel %vm1097, %v1095, %v866
        %v1113 = vsel %vm1097, %v1096, %v868
        %vm1114 = vcmask 228352
        %v1115 = vsel %vm1114, %v1098, %v902
        %v1116 = vsel %vm1114, %v1099, %v904
        %v1117 = vsel %vm1114, %v1100, %v906
        %v1118 = vsel %vm1114, %v1101, %v908
        %v1119 = vsel %vm1114, %v1102, %v910
        %v1120 = vsel %vm1114, %v1103, %v912
        %v1121 = vsel %vm1114, %v1104, %v914
        %v1122 = vsel %vm1114, %v1105, %v916
        %v1123 = vsel %vm1114, %v1106, %v918
        %v1124 = vsel %vm1114, %v1107, %v920
        %v1125 = vsel %vm1114, %v1108, %v922
        %v1126 = vsel %vm1114, %v1109, %v924
        %v1127 = vsel %vm1114, %v1110, %v926
        %v1128 = vsel %vm1114, %v1111, %v928
        %v1129 = vsel %vm1114, %v1112, %v930
        %v1130 = vsel %vm1114, %v1113, %v932
        %vm1131 = vcmask 261120
        %v1132 = vsel %vm1131, %v1115, %v966
        %v1133 = vsel %vm1131, %v1116, %v968
        %v1134 = vsel %vm1131, %v1117, %v970
        %v1135 = vsel %vm1131, %v1118, %v972
        %v1136 = vsel %vm1131, %v1119, %v974
        %v1137 = vsel %vm1131, %v1120, %v976
        %v1138 = vsel %vm1131, %v1121, %v978
        %v1139 = vsel %vm1131, %v1122, %v980
        %v1140 = vsel %vm1131, %v1123, %v982
        %v1141 = vsel %vm1131, %v1124, %v984
        %v1142 = vsel %vm1131, %v1125, %v986
        %v1143 = vsel %vm1131, %v1126, %v988
        %v1144 = vsel %vm1131, %v1127, %v990
        %v1145 = vsel %vm1131, %v1128, %v992
        %v1146 = vsel %vm1131, %v1129, %v994
        %v1147 = vsel %vm1131, %v1130, %v996
        %v1148 = vpack.c.bf16 %v1133, %v1132
        %v1149 = vpack.c.bf16 %v1135, %v1134
        %v1150 = vpack.c.bf16 %v1137, %v1136
        %v1151 = vpack.c.bf16 %v1139, %v1138
        %v1152 = vpack.c.bf16 %v1141, %v1140
        %v1153 = vpack.c.bf16 %v1143, %v1142
        %v1154 = vpack.c.bf16 %v1145, %v1144
        %v1155 = vpack.c.bf16 %v1147, %v1146
        %v1156 = vld [vmem:[%s1] sm:$0xf]
        %v1157 = vld [vmem:[%s1 + $0x4] sm:$0xf]
        %v1158 = vld [vmem:[%s1 + $0x8] sm:$0xf]
        %v1159 = vld [vmem:[%s1 + $0xc] sm:$0xf]
        %v1160 = vld [vmem:[%s1 + $0x10] sm:$0x3]
        %v1166 = vunpack.c.l.b16 %v1156
        %v1167 = vunpack.c.l.b16 %v1157
        %v1168 = vunpack.c.l.b16 %v1158
        %v1169 = vunpack.c.l.b16 %v1159
        %v1170 = vunpack.c.l.b16 %v1160
        %v1171 = vpack.c.b16 %v1167, %v1166
        %v1172 = vpack.c.b16 %v1169, %v1168
        %v1173 = vpack.c.b16 %v1170, %v1170
        %vm1176 = vcmask 293888
        %v1178 = vsel %vm1176, %v1148, 0
        %v1181 = vsel %vm1176, %v1149, 0
        %v1184 = vsel %vm1176, %v1150, 0
        %v1187 = vsel %vm1176, %v1151, 0
        %v1190 = vsel %vm1176, %v1152, 0
        %v1193 = vsel %vm1176, %v1153, 0
        %v1196 = vsel %vm1176, %v1154, 0
        %v1199 = vsel %vm1176, %v1155, 0
        %vm1201 = vcmask 1041408
        %v1203 = vsel %vm1201, %v1173, 0
        %1205 = vmatpush.bf16.msra.mxu0 0
        %1206 = vmatpush.bf16.msra.mxu0 0
        %1207 = vmatpush.bf16.msra.mxu0 0
        %1208 = vmatpush.bf16.msra.mxu0 0
        %1209 = vmatpush.bf16.msra.mxu0 0
        %1210 = vmatpush.bf16.msra.mxu0 %v1203
        %1211 = vmatpush.bf16.msra.mxu0 %v1172
        %1212 = vmatpush.bf16.msra.mxu0 %v1171
        %1213 = vmatmul.bf16.gmra.mxu0 %v1178
        %v1214 = vpop.f32.mrf.mxu0
        %v1215 = vadd.f32 0.0, %v1214
        %v1216 = vpop.f32.mrf.mxu0
        %v1217 = vadd.f32 0.0, %v1216
        %1218 = vmatmul.bf16.gmra.mxu0 %v1181
        %v1219 = vpop.f32.mrf.mxu0
        %v1220 = vadd.f32 0.0, %v1219
        %v1221 = vpop.f32.mrf.mxu0
        %v1222 = vadd.f32 0.0, %v1221
        %1223 = vmatmul.bf16.gmra.mxu0 %v1184
        %v1224 = vpop.f32.mrf.mxu0
        %v1225 = vadd.f32 0.0, %v1224
        %v1226 = vpop.f32.mrf.mxu0
        %v1227 = vadd.f32 0.0, %v1226
        %1228 = vmatmul.bf16.gmra.mxu0 %v1187
        %v1229 = vpop.f32.mrf.mxu0
        %v1230 = vadd.f32 0.0, %v1229
        %v1231 = vpop.f32.mrf.mxu0
        %v1232 = vadd.f32 0.0, %v1231
        %1233 = vmatmul.bf16.gmra.mxu0 %v1190
        %v1234 = vpop.f32.mrf.mxu0
        %v1235 = vadd.f32 0.0, %v1234
        %v1236 = vpop.f32.mrf.mxu0
        %v1237 = vadd.f32 0.0, %v1236
        %1238 = vmatmul.bf16.gmra.mxu0 %v1193
        %v1239 = vpop.f32.mrf.mxu0
        %v1240 = vadd.f32 0.0, %v1239
        %v1241 = vpop.f32.mrf.mxu0
        %v1242 = vadd.f32 0.0, %v1241
        %1243 = vmatmul.bf16.gmra.mxu0 %v1196
        %v1244 = vpop.f32.mrf.mxu0
        %v1245 = vadd.f32 0.0, %v1244
        %v1246 = vpop.f32.mrf.mxu0
        %v1247 = vadd.f32 0.0, %v1246
        %1248 = vmatmul.bf16.gmra.mxu0 %v1199
        %v1249 = vpop.f32.mrf.mxu0
        %v1250 = vadd.f32 0.0, %v1249
        %v1251 = vpop.f32.mrf.mxu0
        %v1252 = vadd.f32 0.0, %v1251
        %1253 = vdwg.mxu0
        %1254 = vst.msk [vmem:[%s259] sm:$0xff] %vm1029, %v1215
        %1255 = vst.msk [vmem:[%s259 + $0x8] sm:$0xff] %vm1029, %v1217
        %1256 = vst.msk [vmem:[%s259 + $0x10] sm:$0xff] %vm1029, %v1220
        %1257 = vst.msk [vmem:[%s259 + $0x18] sm:$0xff] %vm1029, %v1222
        %1258 = vst.msk [vmem:[%s259 + $0x20] sm:$0xff] %vm1029, %v1225
        %1259 = vst.msk [vmem:[%s259 + $0x28] sm:$0xff] %vm1029, %v1227
        %1260 = vst.msk [vmem:[%s259 + $0x30] sm:$0xff] %vm1029, %v1230
        %1261 = vst.msk [vmem:[%s259 + $0x38] sm:$0xff] %vm1029, %v1232
        %1262 = vst.msk [vmem:[%s259 + $0x40] sm:$0xff] %vm1029, %v1235
        %1263 = vst.msk [vmem:[%s259 + $0x48] sm:$0xff] %vm1029, %v1237
        %1264 = vst.msk [vmem:[%s259 + $0x50] sm:$0xff] %vm1029, %v1240
        %1265 = vst.msk [vmem:[%s259 + $0x58] sm:$0xff] %vm1029, %v1242
        %1266 = vst.msk [vmem:[%s259 + $0x60] sm:$0xff] %vm1029, %v1245
        %1267 = vst.msk [vmem:[%s259 + $0x68] sm:$0xff] %vm1029, %v1247
        %1268 = vst.msk [vmem:[%s259 + $0x70] sm:$0xff] %vm1029, %v1250
        %1269 = vst.msk [vmem:[%s259 + $0x78] sm:$0xff] %vm1029, %v1252
        %v1270 = vsel %vm1029, %v1215, 0.0
        %v1271 = vsel %vm1029, %v1217, 0.0
        %v1272 = vadd.f32 %v1270, %v1271
        %v1273 = vsel %vm1029, %v1220, 0.0
        %v1274 = vadd.f32 %v1272, %v1273
        %v1275 = vsel %vm1029, %v1222, 0.0
        %v1276 = vadd.f32 %v1274, %v1275
        %v1277 = vsel %vm1029, %v1225, 0.0
        %v1278 = vadd.f32 %v1276, %v1277
        %v1279 = vsel %vm1029, %v1227, 0.0
        %v1280 = vadd.f32 %v1278, %v1279
        %v1281 = vsel %vm1029, %v1230, 0.0
        %v1282 = vadd.f32 %v1280, %v1281
        %v1283 = vsel %vm1029, %v1232, 0.0
        %v1284 = vadd.f32 %v1282, %v1283
        %v1285 = vsel %vm1029, %v1235, 0.0
        %v1286 = vadd.f32 %v1284, %v1285
        %v1287 = vsel %vm1029, %v1237, 0.0
        %v1288 = vadd.f32 %v1286, %v1287
        %v1289 = vsel %vm1029, %v1240, 0.0
        %v1290 = vadd.f32 %v1288, %v1289
        %v1291 = vsel %vm1029, %v1242, 0.0
        %v1292 = vadd.f32 %v1290, %v1291
        %v1293 = vsel %vm1029, %v1245, 0.0
        %v1294 = vadd.f32 %v1292, %v1293
        %v1295 = vsel %vm1029, %v1247, 0.0
        %v1296 = vadd.f32 %v1294, %v1295
        %v1297 = vsel %vm1029, %v1250, 0.0
        %v1298 = vadd.f32 %v1296, %v1297
        %v1299 = vsel %vm1029, %v1252, 0.0
        %v1300 = vadd.f32 %v1298, %v1299
        %v1301 = vrot.slane %v1300, 4
        %v1302 = vadd.f32 %v1300, %v1301
        %v1303 = vrot.slane %v1302, 2
        %v1304 = vadd.f32 %v1302, %v1303
        %v1305 = vrot.slane %v1304, 1
        %v1306 = vadd.f32 %v1304, %v1305
        %vm1307 = vcmask 57344
        %1308 = vst.msk [vmem:[%s245] sm:$0x1] %vm1307, %v1306
        %v1309 = vmul.f32 %v1215, %v1215
        %v1310 = vmul.f32 %v1217, %v1217
        %v1311 = vmul.f32 %v1220, %v1220
        %v1312 = vmul.f32 %v1222, %v1222
        %v1313 = vmul.f32 %v1225, %v1225
        %v1314 = vmul.f32 %v1227, %v1227
        %v1315 = vmul.f32 %v1230, %v1230
        %v1316 = vmul.f32 %v1232, %v1232
        %v1317 = vmul.f32 %v1235, %v1235
        %v1318 = vmul.f32 %v1237, %v1237
        %v1319 = vmul.f32 %v1240, %v1240
        %v1320 = vmul.f32 %v1242, %v1242
        %v1321 = vmul.f32 %v1245, %v1245
        %v1322 = vmul.f32 %v1247, %v1247
        %v1323 = vmul.f32 %v1250, %v1250
        %v1324 = vmul.f32 %v1252, %v1252
        %v1325 = vsel %vm1029, %v1309, 0.0
        %v1326 = vsel %vm1029, %v1310, 0.0
        %v1327 = vadd.f32 %v1325, %v1326
        %v1328 = vsel %vm1029, %v1311, 0.0
        %v1329 = vadd.f32 %v1327, %v1328
        %v1330 = vsel %vm1029, %v1312, 0.0
        %v1331 = vadd.f32 %v1329, %v1330
        %v1332 = vsel %vm1029, %v1313, 0.0
        %v1333 = vadd.f32 %v1331, %v1332
        %v1334 = vsel %vm1029, %v1314, 0.0
        %v1335 = vadd.f32 %v1333, %v1334
        %v1336 = vsel %vm1029, %v1315, 0.0
        %v1337 = vadd.f32 %v1335, %v1336
        %v1338 = vsel %vm1029, %v1316, 0.0
        %v1339 = vadd.f32 %v1337, %v1338
        %v1340 = vsel %vm1029, %v1317, 0.0
        %v1341 = vadd.f32 %v1339, %v1340
        %v1342 = vsel %vm1029, %v1318, 0.0
        %v1343 = vadd.f32 %v1341, %v1342
        %v1344 = vsel %vm1029, %v1319, 0.0
        %v1345 = vadd.f32 %v1343, %v1344
        %v1346 = vsel %vm1029, %v1320, 0.0
        %v1347 = vadd.f32 %v1345, %v1346
        %v1348 = vsel %vm1029, %v1321, 0.0
        %v1349 = vadd.f32 %v1347, %v1348
        %v1350 = vsel %vm1029, %v1322, 0.0
        %v1351 = vadd.f32 %v1349, %v1350
        %v1352 = vsel %vm1029, %v1323, 0.0
        %v1353 = vadd.f32 %v1351, %v1352
        %v1354 = vsel %vm1029, %v1324, 0.0
        %v1355 = vadd.f32 %v1353, %v1354
        %v1356 = vrot.slane %v1355, 4
        %v1357 = vadd.f32 %v1355, %v1356
        %v1358 = vrot.slane %v1357, 2
        %v1359 = vadd.f32 %v1357, %v1358
        %v1360 = vrot.slane %v1359, 1
        %v1361 = vadd.f32 %v1359, %v1360
        %1362 = vst.msk [vmem:[%s245 + $0x1] sm:$0x1] %vm1307, %v1361
        %s1363 = smul.u32 16, %s25
        %p1364 = scmp.lt.s32.totalorder %s24, 1
        %s1365 = scalar_select %p1364, %s24, 1
        %p1366 = scmp.lt.s32.totalorder %s1363, 31
        %s1367 = scalar_select %p1366, %s1363, 31
        %s1368 = smul.addr %s1365, 32
        %s1369 = sadd.s32 %s1367, %s1368
        %s1370 = smul.addr %s1369, 8
        %s1371 = scalar_lea.vmem %s4, %s1370
        %s1372 = sand.u32 %s159, 1
        %s1373 = scalar_lea.sflag [#allocation4], %s1372
        %s1374 = sand.u32 %s159, 1
        %s1375 = smul.addr %s1374, 2
        %s1376 = scalar_lea.vmem [#allocation3], %s1375
        // Predicated region
        $region53: #{tpu_custom_call.1} parent=35 // pred_check
          %p1377 = pneg %p141
        $region54: #{tpu_custom_call.1} parent=35 // pred_check_branch
          %1379 = sbr.rel (%p1377) target = $region56
        $region55: #{tpu_custom_call.1} parent=35 // pred_region
          %s1380 = smul.u32 16, %s25
        $region56: #{tpu_custom_call.1} parent=35 // pred_fallthru
          _
        // Predicated region
        $region57: #{tpu_custom_call.1} parent=35 // pred_check
          %p1381 = pneg %p169
        $region58: #{tpu_custom_call.1} parent=35 // pred_check_branch
          %1383 = sbr.rel (%p1381) target = $region60
        $region59: #{tpu_custom_call.1} parent=35 // pred_region
          %1385 = vsyncadd %s1373, 0
          %s1386 = smul.addr %s24, 2
          %s1387 = sadd.s32 %s25, %s1386
          %s1388 = smul.addr %s1387, 2
          %s1389 = scalar_lea.hbm %s5, %s1388
          %s1391 = sshll.u32 %s1376, 4
          %s1392 = int_to_ptr.vmem [resolvable:$true] %s1391
          %s1393 = sshll.u32 %s1389, 4
          %s1394 = int_to_ptr.hbm [resolvable:$true] %s1393
          %1396 = dma.vmem_to_hbm [thread:$0]  %s1392, 32, %s1394, %s1373
        $region60: #{tpu_custom_call.1} parent=35 // pred_fallthru
          _
      $region36: #{tpu_custom_call.1} parent=5 // pred_fallthru
        _
      %p1397 = scmp.le.s32.totalorder 2, %s15
      // Predicated region
      $region61: #{tpu_custom_call.1} parent=5 // pred_check
        %p1398 = pneg %p1397
      $region62: #{tpu_custom_call.1} parent=5 // pred_check_branch
        %1400 = sbr.rel (%p1398) target = $region64
      $region63: #{tpu_custom_call.1} parent=5 // pred_region
        %s1401 = ssub.s32 %s15, 2
        // Predicated region
        $region65: #{tpu_custom_call.1} parent=63 // pred_check
          %p1402 = pneg %p147
        $region66: #{tpu_custom_call.1} parent=63 // pred_check_branch
          %1404 = sbr.rel (%p1402) target = $region68
        $region67: #{tpu_custom_call.1} parent=63 // pred_region
          %s1405 = smul.u32 16, %s27
          %p1406 = scmp.lt.s32.totalorder %s26, 1
          %s1407 = scalar_select %p1406, %s26, 1
          %p1408 = scmp.lt.s32.totalorder %s1405, 31
          %s1409 = scalar_select %p1408, %s1405, 31
          %s1410 = smul.addr %s1407, 32
          %s1411 = sadd.s32 %s1409, %s1410
          %s1412 = smul.addr %s1411, 8
          %s1413 = scalar_lea.vmem %s4, %s1412
        $region68: #{tpu_custom_call.1} parent=63 // pred_fallthru
          _
        // Predicated region
        $region69: #{tpu_custom_call.1} parent=63 // pred_check
          %p1414 = pneg %p175
        $region70: #{tpu_custom_call.1} parent=63 // pred_check_branch
          %1416 = sbr.rel (%p1414) target = $region72
        $region71: #{tpu_custom_call.1} parent=63 // pred_region
          %s1417 = sand.u32 %s160, 1
          %s1418 = scalar_lea.sflag [#allocation4], %s1417
          %s1419 = sand.u32 %s160, 1
          %s1420 = smul.addr %s1419, 2
          %s1421 = scalar_lea.vmem [#allocation3], %s1420
          %1423 = dma.done %s1418, 32
        $region72: #{tpu_custom_call.1} parent=63 // pred_fallthru
          _
      $region64: #{tpu_custom_call.1} parent=5 // pred_fallthru
        _
    $region6: #{tpu_custom_call.1} parent=1 // loop_footer
      %s19 = sadd.s32 1, %s15
    $region7: #{tpu_custom_call.1} parent=1 // loop_footer_branch
      %14 = sbr.rel target = $region3
    $region8: #{tpu_custom_call.1} parent=1 // loop_exit
      _
    %1424 = vsyncpa [#allocation4], 1
    %s1425 = scalar_lea.sflag [#allocation4], 1
    %1426 = vsyncpa %s1425, 1

</llo_original>
